<compile_context>
chip_gen: v7x
topology: tpu7x:2x2x1
jax: 0.10.0
libtpu: 0.0.40
codegen_flags: <defaults>
</compile_context>

<pallas_src>
import jax
import jax.numpy as jnp
import numpy as np
from jax.experimental import pallas as pl
from jax.experimental.pallas import tpu as pltpu

FP = 128                    # padded (lane-dense) feature width of every layer
F_FUSED = 2 * FP            # [ xs | a_src | a_dst | ones | 0 ]  |  [ skip ]
COL_ASRC = FP - 4           # 124: <x@W_src, att_src>
COL_ADST = FP - 3           # 125: <x@W_dst, att_dst>
COL_ONE = FP - 2            # 126: constant-1 column -> p @ xs gives row-sum(p) here (denominator)
COL_CARRY = FP - 1          # 127: output column forced to exactly 1.0 (next layer's ones source)
IN_ONE = FP - 1             # 127: input-feature slot that holds the constant 1


def gat2_kernel(x_ref, adj_ref, w1_ref, b1_ref, w2_ref, b2_ref, out_ref):
    # adjacency-derived tensors computed ONCE (int8 stays resident) and reused by both layers
    adj_f = adj_ref[...].astype(jnp.float32)                      # (N, N), adj[dst, src]
    neg_bias = (adj_f - 1.0) * jnp.float32(1e30)                  # 0 on edges, -1e30 off-edge
    row_valid = (jnp.sum(adj_f, axis=-1, keepdims=True) > 0.0).astype(jnp.float32)  # (N, 1)

    def layer(h_b, w_ref, b_ref):
        # one bf16 MXU pass: xs | attention scalars | ones-for-denominator | skip branch
        proj = jnp.dot(h_b, w_ref[...], preferred_element_type=jnp.float32)   # (N, 2*FP) f32
        xs_b = proj[:, 0:FP].astype(jnp.bfloat16)                 # aggregation RHS (incl. ones col)
        skip = proj[:, FP:2 * FP]                                 # linear skip branch (f32)
        a_src = proj[:, COL_ASRC:COL_ASRC + 1]                    # (N, 1)
        a_dst = proj[:, COL_ADST:COL_ADST + 1]                    # (N, 1)

        # edge logits e[i,j] = a_dst[i] + a_src[j]; select-free leaky_relu(0.2); mask as additive
        # bias: off-edge entries sit at -1e30 so exp(e - m) is exactly 0 there (no where needed).
        logits = a_dst + a_src.T                                  # (N, N)
        e = 0.6 * logits + 0.4 * jnp.abs(logits) + neg_bias
        m = jnp.max(e, axis=-1, keepdims=True)
        # (v6e/v7x could run exp in bf16; kept f32 so v5e stays on its native EUP path)
        p_b = jnp.exp(e - m).astype(jnp.bfloat16)                 # unnormalized attention (N, N)

        # aggregation on the MXU (bf16 in / f32 acc); col COL_ONE of agg is the softmax denominator
        agg = jnp.dot(p_b, xs_b, preferred_element_type=jnp.float32)          # (N, FP)
        denom = agg[:, COL_ONE:COL_ONE + 1]
        inv = pl.reciprocal(jnp.where(denom > 0.0, denom, 1.0), approx=True) * row_valid
        # rows with no incoming edge (isolated or padding) get agg zeroed -> relu(skip + bias)
        return jnp.maximum(agg * inv + skip + b_ref[...], 0.0)

    h = layer(x_ref[...].astype(jnp.bfloat16), w1_ref, b1_ref)    # layer 1 (hidden never leaves VMEM)
    out_ref[...] = layer(h.astype(jnp.bfloat16), w2_ref, b2_ref)  # layer 2, lane-dense (N,128) store


def fuse_layer_params(params):
    """Host-side: fold W_src / W_lin / attention vectors / both biases into one bf16 (128,256) RHS."""
    f_in, f_out = params["w_src"].shape
    assert f_in <= IN_ONE and f_out <= COL_ASRC, "feature dims too large for the packed layout"
    att_src = params["att_src"].reshape(f_out, 1)
    att_dst = params["att_dst"].reshape(f_out, 1)
    w = jnp.zeros((FP, F_FUSED), jnp.float32)
    w = w.at[:f_in, 0:f_out].set(params["w_src"])                        # xs features
    w = w.at[:f_in, COL_ASRC:COL_ASRC + 1].set(params["w_src"] @ att_src)
    w = w.at[:f_in, COL_ADST:COL_ADST + 1].set(params["w_dst"] @ att_dst)
    w = w.at[IN_ONE, COL_ONE].set(1.0)                                   # ones column (denominator)
    w = w.at[:f_in, FP:FP + f_out].set(params["w_lin"])                  # skip branch
    b = jnp.zeros((1, FP), jnp.float32)
    b = b.at[:, :f_out].set(params["b_gat"] + params["b_lin"])           # combined bias
    b = b.at[:, COL_CARRY].set(1.0)                                      # exact 1 carried to next layer
    return w.astype(jnp.bfloat16), b


def _vmem_limit_bytes():
    # ~15% headroom below physical VMEM: ≈54 MiB on v7x (64 MiB/TC), ≈109 MiB on v5e/v6e (128 MiB).
    try:
        cap = pltpu.get_tpu_info().vmem_capacity_bytes
    except Exception:
        cap = 64 * 1024 * 1024        # conservative fallback, safe on every generation
    return int(cap * 0.85)


@jax.jit
def gat_forward(x, adj, params1, params2):
    n, f_in = x.shape
    out_channels = params2["w_src"].shape[1]
    n_pad = ((n + 127) // 128) * 128     # lane-dense source axis; also 32-aligned int8 rows

    x_p = (jnp.zeros((n_pad, FP), jnp.float32)
           .at[:n, :f_in].set(x)
           .at[:, IN_ONE].set(1.0))      # constant-1 feature feeding the denominator column
    # adjacency is binary (built from edge_index); int8 keeps the largest DMA 4x smaller than f32
    adj_p = jnp.zeros((n_pad, n_pad), jnp.int8).at[:n, :n].set(adj.astype(jnp.int8))

    w1, b1 = fuse_layer_params(params1)
    w2, b2 = fuse_layer_params(params2)

    vmem_limit = _vmem_limit_bytes()
    # rough monolithic-footprint guard (~16 B / node^2 of resident N^2 intermediates)
    assert 16 * n_pad * n_pad < vmem_limit, (
        "graph too large for the monolithic kernel; TODO(synk): tiled/online-softmax variant")

    vmem = pl.BlockSpec(memory_space=pltpu.MemorySpace.VMEM)
    out_pad = pl.pallas_call(
        gat2_kernel,
        out_shape=jax.ShapeDtypeStruct((n_pad, FP), jnp.float32),
        in_specs=[vmem] * 6,
        out_specs=vmem,
        compiler_params=pltpu.CompilerParams(vmem_limit_bytes=vmem_limit),
    )(x_p, adj_p, w1, b1, w2, b2)
    return out_pad[:n, :out_channels]


def init_layer_params(key, f_in, f_out):
    ks = jax.random.split(key, 7)
    s_in = 1.0 / np.sqrt(f_in)
    s_h = 1.0 / np.sqrt(f_out)
    return {
        "w_src":   jax.random.normal(ks[0], (f_in, f_out), jnp.float32) * s_in,
        "w_dst":   jax.random.normal(ks[1], (f_in, f_out), jnp.float32) * s_in,
        "att_src": jax.random.normal(ks[2], (1, f_out), jnp.float32) * s_h,
        "att_dst": jax.random.normal(ks[3], (1, f_out), jnp.float32) * s_h,
        "b_gat":   jax.random.normal(ks[4], (1, f_out), jnp.float32) * 0.1,
        "w_lin":   jax.random.normal(ks[5], (f_in, f_out), jnp.float32) * s_in,
        "b_lin":   jax.random.normal(ks[6], (1, f_out), jnp.float32) * 0.1,
    }


def gat_layer_ref(x, adj_f, p):
    """Pure-JAX f32 reference (PyG GATConv heads=1 + Linear skip + ReLU)."""
    xs = x @ p["w_src"]
    xd = x @ p["w_dst"]
    a_src = jnp.sum(xs * p["att_src"], -1, keepdims=True)
    a_dst = jnp.sum(xd * p["att_dst"], -1, keepdims=True)
    e = a_dst + a_src.T
    e = jnp.where(e > 0, e, 0.2 * e)
    e = jnp.where(adj_f > 0, e, -1e30)
    m = jnp.max(e, -1, keepdims=True)
    pr = jnp.where(adj_f > 0, jnp.exp(e - m), 0.0)
    d = jnp.sum(pr, -1, keepdims=True)
    attn = pr / jnp.where(d > 0, d, 1.0)
    gat = attn @ xs + p["b_gat"]
    return jnp.maximum(gat + x @ p["w_lin"] + p["b_lin"], 0.0)


if __name__ == "__main__":
    N, F_IN, HIDDEN, OUT = 16, 8, 32, 16

    key = jax.random.PRNGKey(0)
    kx, k1, k2 = jax.random.split(key, 3)

    x = jax.random.normal(kx, (N, F_IN), jnp.float32)

    # Deterministic edge_index: bidirectional ring plus skip-2 connections (no self loops).
    src, dst = [], []
    for i in range(N):
        for j in (i + 1, i - 1, i + 2):
            src.append(j % N)
            dst.append(i)
    adj_np = np.zeros((N, N), np.int8)
    adj_np[np.array(dst), np.array(src)] = 1                 # adj[dst, src] (PyG edge_index order)
    adj = jnp.asarray(adj_np)

    params1 = init_layer_params(k1, F_IN, HIDDEN)
    params2 = init_layer_params(k2, HIDDEN, OUT)

    out = gat_forward(x, adj, params1, params2)
    jax.block_until_ready(out)
    assert out.shape == (N, OUT)

    # Tolerance check vs f32 reference (end-to-end bf16 MXU paths + approx reciprocal drift).
    adj_f = adj.astype(jnp.float32)
    ref = gat_layer_ref(gat_layer_ref(x, adj_f, params1), adj_f, params2)
    np.testing.assert_allclose(np.asarray(out), np.asarray(ref), rtol=5e-2, atol=1e-1)

    print("KERNEL_OK")
</pallas_src>

<mosaic_0001>
module attributes {stable_mosaic.version = 11 : i64} {
  func.func @gat2_kernel(%arg0: memref<128x128xf32, #tpu.memory_space<vmem>>, %arg1: memref<128x128xi8, #tpu.memory_space<vmem>>, %arg2: memref<128x256xbf16, #tpu.memory_space<vmem>>, %arg3: memref<1x128xf32, #tpu.memory_space<vmem>>, %arg4: memref<128x256xbf16, #tpu.memory_space<vmem>>, %arg5: memref<1x128xf32, #tpu.memory_space<vmem>>, %arg6: memref<128x128xf32, #tpu.memory_space<vmem>>) attributes {dimension_semantics = [], scalar_prefetch = 0 : i64, scratch_operands = 0 : i64, tpu.core_type = #tpu.core_type<tc>} {
    %c0 = arith.constant 0 : index
    %c0_0 = arith.constant 0 : index
    %0 = vector.load %arg1[%c0, %c0_0] : memref<128x128xi8, #tpu.memory_space<vmem>>, vector<128x128xi8>
    %1 = arith.sitofp %0 : vector<128x128xi8> to vector<128x128xf32>
    %cst = arith.constant 1.000000e+00 : f32
    %2 = vector.broadcast %cst : f32 to vector<128x128xf32>
    %3 = arith.subf %1, %2 : vector<128x128xf32>
    %cst_1 = arith.constant 1.000000e+30 : f32
    %4 = vector.broadcast %cst_1 : f32 to vector<128x128xf32>
    %5 = arith.mulf %3, %4 : vector<128x128xf32>
    %cst_2 = arith.constant dense<0.000000e+00> : vector<128xf32>
    %6 = vector.multi_reduction <add>, %1, %cst_2 [1] : vector<128x128xf32> to vector<128xf32>
    %7 = vector.shape_cast %6 : vector<128xf32> to vector<128x1xf32>
    %cst_3 = arith.constant 0.000000e+00 : f32
    %8 = vector.broadcast %cst_3 : f32 to vector<128x1xf32>
    %9 = arith.cmpf ogt, %7, %8 : vector<128x1xf32>
    %10 = arith.extui %9 : vector<128x1xi1> to vector<128x1xi32>
    %11 = arith.sitofp %10 : vector<128x1xi32> to vector<128x1xf32>
    %c0_4 = arith.constant 0 : index
    %c0_5 = arith.constant 0 : index
    %12 = vector.load %arg0[%c0_4, %c0_5] : memref<128x128xf32, #tpu.memory_space<vmem>>, vector<128x128xf32>
    %13 = arith.truncf %12 : vector<128x128xf32> to vector<128x128xbf16>
    %c0_6 = arith.constant 0 : index
    %c0_7 = arith.constant 0 : index
    %14 = vector.load %arg2[%c0_6, %c0_7] : memref<128x256xbf16, #tpu.memory_space<vmem>>, vector<128x256xbf16>
    %cst_8 = arith.constant dense<0.000000e+00> : vector<128x256xf32>
    %15 = tpu.matmul %13, %14, %cst_8 {dimension_numbers = #tpu.dot_dimension_numbers<[1], [0], [0], [1], [0, 0, 1, 1], [], []>} : vector<128x128xbf16>, vector<128x256xbf16>, vector<128x256xf32> -> vector<128x256xf32>
    %16 = vector.extract_strided_slice %15 {offsets = [0, 0], sizes = [128, 128], strides = [1, 1]} : vector<128x256xf32> to vector<128x128xf32>
    %17 = arith.truncf %16 : vector<128x128xf32> to vector<128x128xbf16>
    %18 = vector.extract_strided_slice %15 {offsets = [0, 128], sizes = [128, 128], strides = [1, 1]} : vector<128x256xf32> to vector<128x128xf32>
    %19 = vector.extract_strided_slice %15 {offsets = [0, 124], sizes = [128, 1], strides = [1, 1]} : vector<128x256xf32> to vector<128x1xf32>
    %20 = vector.extract_strided_slice %15 {offsets = [0, 125], sizes = [128, 1], strides = [1, 1]} : vector<128x256xf32> to vector<128x1xf32>
    %21 = tpu.transpose %19, [1, 0] : vector<128x1xf32> -> vector<1x128xf32>
    %22 = vector.broadcast %20 : vector<128x1xf32> to vector<128x128xf32>
    %23 = vector.broadcast %21 : vector<1x128xf32> to vector<128x128xf32>
    %24 = arith.addf %22, %23 : vector<128x128xf32>
    %cst_9 = arith.constant 6.000000e-01 : f32
    %25 = vector.broadcast %cst_9 : f32 to vector<128x128xf32>
    %26 = arith.mulf %25, %24 : vector<128x128xf32>
    %27 = math.absf %24 : vector<128x128xf32>
    %cst_10 = arith.constant 4.000000e-01 : f32
    %28 = vector.broadcast %cst_10 : f32 to vector<128x128xf32>
    %29 = arith.mulf %28, %27 : vector<128x128xf32>
    %30 = arith.addf %26, %29 : vector<128x128xf32>
    %31 = arith.addf %30, %5 : vector<128x128xf32>
    %cst_11 = arith.constant dense<0xFF800000> : vector<128xf32>
    %32 = vector.multi_reduction <maximumf>, %31, %cst_11 [1] : vector<128x128xf32> to vector<128xf32>
    %33 = vector.shape_cast %32 : vector<128xf32> to vector<128x1xf32>
    %34 = vector.broadcast %33 : vector<128x1xf32> to vector<128x128xf32>
    %35 = arith.subf %31, %34 : vector<128x128xf32>
    %36 = math.exp %35 : vector<128x128xf32>
    %37 = arith.truncf %36 : vector<128x128xf32> to vector<128x128xbf16>
    %cst_12 = arith.constant dense<0.000000e+00> : vector<128x128xf32>
    %38 = tpu.matmul %37, %17, %cst_12 {dimension_numbers = #tpu.dot_dimension_numbers<[1], [0], [0], [1], [0, 0, 1, 1], [], []>} : vector<128x128xbf16>, vector<128x128xbf16>, vector<128x128xf32> -> vector<128x128xf32>
    %39 = vector.extract_strided_slice %38 {offsets = [0, 126], sizes = [128, 1], strides = [1, 1]} : vector<128x128xf32> to vector<128x1xf32>
    %cst_13 = arith.constant 0.000000e+00 : f32
    %40 = vector.broadcast %cst_13 : f32 to vector<128x1xf32>
    %41 = arith.cmpf ogt, %39, %40 : vector<128x1xf32>
    %cst_14 = arith.constant 1.000000e+00 : f32
    %42 = vector.broadcast %cst_14 : f32 to vector<128x1xf32>
    %43 = arith.select %41, %39, %42 : vector<128x1xi1>, vector<128x1xf32>
    %44 = tpu.reciprocal %43 {approx = true} : vector<128x1xf32> -> vector<128x1xf32>
    %45 = arith.mulf %44, %11 : vector<128x1xf32>
    %46 = vector.broadcast %45 : vector<128x1xf32> to vector<128x128xf32>
    %47 = arith.mulf %38, %46 : vector<128x128xf32>
    %48 = arith.addf %47, %18 : vector<128x128xf32>
    %c0_15 = arith.constant 0 : index
    %c0_16 = arith.constant 0 : index
    %49 = vector.load %arg3[%c0_15, %c0_16] : memref<1x128xf32, #tpu.memory_space<vmem>>, vector<1x128xf32>
    %50 = vector.broadcast %49 : vector<1x128xf32> to vector<128x128xf32>
    %51 = arith.addf %48, %50 : vector<128x128xf32>
    %cst_17 = arith.constant 0.000000e+00 : f32
    %52 = vector.broadcast %cst_17 : f32 to vector<128x128xf32>
    %53 = arith.maximumf %51, %52 : vector<128x128xf32>
    %54 = arith.truncf %53 : vector<128x128xf32> to vector<128x128xbf16>
    %c0_18 = arith.constant 0 : index
    %c0_19 = arith.constant 0 : index
    %55 = vector.load %arg4[%c0_18, %c0_19] : memref<128x256xbf16, #tpu.memory_space<vmem>>, vector<128x256xbf16>
    %cst_20 = arith.constant dense<0.000000e+00> : vector<128x256xf32>
    %56 = tpu.matmul %54, %55, %cst_20 {dimension_numbers = #tpu.dot_dimension_numbers<[1], [0], [0], [1], [0, 0, 1, 1], [], []>} : vector<128x128xbf16>, vector<128x256xbf16>, vector<128x256xf32> -> vector<128x256xf32>
    %57 = vector.extract_strided_slice %56 {offsets = [0, 0], sizes = [128, 128], strides = [1, 1]} : vector<128x256xf32> to vector<128x128xf32>
    %58 = arith.truncf %57 : vector<128x128xf32> to vector<128x128xbf16>
    %59 = vector.extract_strided_slice %56 {offsets = [0, 128], sizes = [128, 128], strides = [1, 1]} : vector<128x256xf32> to vector<128x128xf32>
    %60 = vector.extract_strided_slice %56 {offsets = [0, 124], sizes = [128, 1], strides = [1, 1]} : vector<128x256xf32> to vector<128x1xf32>
    %61 = vector.extract_strided_slice %56 {offsets = [0, 125], sizes = [128, 1], strides = [1, 1]} : vector<128x256xf32> to vector<128x1xf32>
    %62 = tpu.transpose %60, [1, 0] : vector<128x1xf32> -> vector<1x128xf32>
    %63 = vector.broadcast %61 : vector<128x1xf32> to vector<128x128xf32>
    %64 = vector.broadcast %62 : vector<1x128xf32> to vector<128x128xf32>
    %65 = arith.addf %63, %64 : vector<128x128xf32>
    %cst_21 = arith.constant 6.000000e-01 : f32
    %66 = vector.broadcast %cst_21 : f32 to vector<128x128xf32>
    %67 = arith.mulf %66, %65 : vector<128x128xf32>
    %68 = math.absf %65 : vector<128x128xf32>
    %cst_22 = arith.constant 4.000000e-01 : f32
    %69 = vector.broadcast %cst_22 : f32 to vector<128x128xf32>
    %70 = arith.mulf %69, %68 : vector<128x128xf32>
    %71 = arith.addf %67, %70 : vector<128x128xf32>
    %72 = arith.addf %71, %5 : vector<128x128xf32>
    %cst_23 = arith.constant dense<0xFF800000> : vector<128xf32>
    %73 = vector.multi_reduction <maximumf>, %72, %cst_23 [1] : vector<128x128xf32> to vector<128xf32>
    %74 = vector.shape_cast %73 : vector<128xf32> to vector<128x1xf32>
    %75 = vector.broadcast %74 : vector<128x1xf32> to vector<128x128xf32>
    %76 = arith.subf %72, %75 : vector<128x128xf32>
    %77 = math.exp %76 : vector<128x128xf32>
    %78 = arith.truncf %77 : vector<128x128xf32> to vector<128x128xbf16>
    %cst_24 = arith.constant dense<0.000000e+00> : vector<128x128xf32>
    %79 = tpu.matmul %78, %58, %cst_24 {dimension_numbers = #tpu.dot_dimension_numbers<[1], [0], [0], [1], [0, 0, 1, 1], [], []>} : vector<128x128xbf16>, vector<128x128xbf16>, vector<128x128xf32> -> vector<128x128xf32>
    %80 = vector.extract_strided_slice %79 {offsets = [0, 126], sizes = [128, 1], strides = [1, 1]} : vector<128x128xf32> to vector<128x1xf32>
    %cst_25 = arith.constant 0.000000e+00 : f32
    %81 = vector.broadcast %cst_25 : f32 to vector<128x1xf32>
    %82 = arith.cmpf ogt, %80, %81 : vector<128x1xf32>
    %cst_26 = arith.constant 1.000000e+00 : f32
    %83 = vector.broadcast %cst_26 : f32 to vector<128x1xf32>
    %84 = arith.select %82, %80, %83 : vector<128x1xi1>, vector<128x1xf32>
    %85 = tpu.reciprocal %84 {approx = true} : vector<128x1xf32> -> vector<128x1xf32>
    %86 = arith.mulf %85, %11 : vector<128x1xf32>
    %87 = vector.broadcast %86 : vector<128x1xf32> to vector<128x128xf32>
    %88 = arith.mulf %79, %87 : vector<128x128xf32>
    %89 = arith.addf %88, %59 : vector<128x128xf32>
    %c0_27 = arith.constant 0 : index
    %c0_28 = arith.constant 0 : index
    %90 = vector.load %arg5[%c0_27, %c0_28] : memref<1x128xf32, #tpu.memory_space<vmem>>, vector<1x128xf32>
    %91 = vector.broadcast %90 : vector<1x128xf32> to vector<128x128xf32>
    %92 = arith.addf %89, %91 : vector<128x128xf32>
    %cst_29 = arith.constant 0.000000e+00 : f32
    %93 = vector.broadcast %cst_29 : f32 to vector<128x128xf32>
    %94 = arith.maximumf %92, %93 : vector<128x128xf32>
    %c0_30 = arith.constant 0 : index
    %c0_31 = arith.constant 0 : index
    %95 = vector.load %arg6[%c0_30, %c0_31] : memref<128x128xf32, #tpu.memory_space<vmem>>, vector<128x128xf32>
    tpu.vector_store %arg6[%c0_30, %c0_31], %94 {strides = array<i32>} : memref<128x128xf32, #tpu.memory_space<vmem>>, vector<128x128xf32>,
    return
  }
}

</mosaic_0001>

<llo_original>
// kernel: gat_forward.1
$region0: #{gat_forward.1}
  #allocation0 [shape = 'u32[]', space=smem, size = 0x4, offset = 0x4, fixed_abs, tag = 'smem constant byte address 0x4 - core index']
  #allocation1 [shape = 'u32[144,128]{1,0:T(1,128)}', space=vmem, size = 0x12000, scoped, tag = 'internal scratch']
  %s0 = inlined_call_operand.vmem [shape: f32[128,128], index: 0, kind: input, shape index: {}]
  %s1 = inlined_call_operand.vmem [shape: s8[128,128], index: 1, kind: input, shape index: {}]
  %s2 = inlined_call_operand.vmem [shape: bf16[128,256], index: 2, kind: input, shape index: {}]
  %s3 = inlined_call_operand.vmem [shape: f32[1,128], index: 3, kind: input, shape index: {}]
  %s4 = inlined_call_operand.vmem [shape: bf16[128,256], index: 4, kind: input, shape index: {}]
  %s5 = inlined_call_operand.vmem [shape: f32[1,128], index: 5, kind: input, shape index: {}]
  %s6 = inlined_call_operand.vmem [shape: f32[128,128], index: 6, kind: output, shape index: {}]
  %s7 = sld [smem:[#allocation0]]
  $region34: #{gat_forward.1} parent=0
    _
  %s9 = ssub.s32 1, %s7
  %s10 = scalar_select 0, %s9, %s7
  // Predicated region
  $region2: #{gat_forward.1} parent=0 // pred_check
    _
  $region3: #{gat_forward.1} parent=0 // pred_check_branch
    %12 = sbr.rel (0) target = $region5
  $region4: #{gat_forward.1} parent=0 // pred_region
    _
  $region5: #{gat_forward.1} parent=0 // pred_fallthru
    _
  // Predicated region
  $region6: #{gat_forward.1} parent=0 // pred_check
    _
  $region7: #{gat_forward.1} parent=0 // pred_check_branch
    %14 = sbr.rel (0) target = $region9
  $region8: #{gat_forward.1} parent=0 // pred_region
    _
  $region9: #{gat_forward.1} parent=0 // pred_fallthru
    _
  // Predicated region
  $region10: #{gat_forward.1} parent=0 // pred_check
    _
  $region11: #{gat_forward.1} parent=0 // pred_check_branch
    %16 = sbr.rel (0) target = $region13
  $region12: #{gat_forward.1} parent=0 // pred_region
    _
  $region13: #{gat_forward.1} parent=0 // pred_fallthru
    _
  // Predicated region
  $region14: #{gat_forward.1} parent=0 // pred_check
    _
  $region15: #{gat_forward.1} parent=0 // pred_check_branch
    %18 = sbr.rel (0) target = $region17
  $region16: #{gat_forward.1} parent=0 // pred_region
    _
  $region17: #{gat_forward.1} parent=0 // pred_fallthru
    _
  // Predicated region
  $region18: #{gat_forward.1} parent=0 // pred_check
    _
  $region19: #{gat_forward.1} parent=0 // pred_check_branch
    %20 = sbr.rel (0) target = $region21
  $region20: #{gat_forward.1} parent=0 // pred_region
    _
  $region21: #{gat_forward.1} parent=0 // pred_fallthru
    _
  // Predicated region
  $region22: #{gat_forward.1} parent=0 // pred_check
    _
  $region23: #{gat_forward.1} parent=0 // pred_check_branch
    %22 = sbr.rel (0) target = $region25
  $region24: #{gat_forward.1} parent=0 // pred_region
    _
  $region25: #{gat_forward.1} parent=0 // pred_fallthru
    _
  %v24 = vld [vmem:[%s1] sm:$0xff]
  %v25 = vld [vmem:[%s1 + $0x8] sm:$0xff]
  %v26 = vld [vmem:[%s1 + $0x10] sm:$0xff]
  %v27 = vld [vmem:[%s1 + $0x18] sm:$0xff]
  %v28 = vunpack.c.0.s8 %v24
  %v29 = vunpack.c.1.s8 %v24
  %v30 = vunpack.c.2.s8 %v24
  %v31 = vunpack.c.3.s8 %v24
  %v32 = vunpack.c.0.s8 %v25
  %v33 = vunpack.c.1.s8 %v25
  %v34 = vunpack.c.2.s8 %v25
  %v35 = vunpack.c.3.s8 %v25
  %v36 = vunpack.c.0.s8 %v26
  %v37 = vunpack.c.1.s8 %v26
  %v38 = vunpack.c.2.s8 %v26
  %v39 = vunpack.c.3.s8 %v26
  %v40 = vunpack.c.0.s8 %v27
  %v41 = vunpack.c.1.s8 %v27
  %v42 = vunpack.c.2.s8 %v27
  %v43 = vunpack.c.3.s8 %v27
  %v44 = vcvt.s32.f32 %v28
  %v45 = vcvt.s32.f32 %v29
  %v46 = vcvt.s32.f32 %v30
  %v47 = vcvt.s32.f32 %v31
  %v48 = vcvt.s32.f32 %v32
  %v49 = vcvt.s32.f32 %v33
  %v50 = vcvt.s32.f32 %v34
  %v51 = vcvt.s32.f32 %v35
  %v52 = vcvt.s32.f32 %v36
  %v53 = vcvt.s32.f32 %v37
  %v54 = vcvt.s32.f32 %v38
  %v55 = vcvt.s32.f32 %v39
  %v56 = vcvt.s32.f32 %v40
  %v57 = vcvt.s32.f32 %v41
  %v58 = vcvt.s32.f32 %v42
  %v59 = vcvt.s32.f32 %v43
  %v60 = vsub.f32 %v44, 1.0
  %v61 = vsub.f32 %v45, 1.0
  %v62 = vsub.f32 %v46, 1.0
  %v63 = vsub.f32 %v47, 1.0
  %v64 = vsub.f32 %v48, 1.0
  %v65 = vsub.f32 %v49, 1.0
  %v66 = vsub.f32 %v50, 1.0
  %v67 = vsub.f32 %v51, 1.0
  %v68 = vsub.f32 %v52, 1.0
  %v69 = vsub.f32 %v53, 1.0
  %v70 = vsub.f32 %v54, 1.0
  %v71 = vsub.f32 %v55, 1.0
  %v72 = vsub.f32 %v56, 1.0
  %v73 = vsub.f32 %v57, 1.0
  %v74 = vsub.f32 %v58, 1.0
  %v75 = vsub.f32 %v59, 1.0
  %v76 = vmul.f32 %v60, 1e+30
  %v77 = vmul.f32 %v61, 1e+30
  %v78 = vmul.f32 %v62, 1e+30
  %v79 = vmul.f32 %v63, 1e+30
  %v80 = vmul.f32 %v64, 1e+30
  %v81 = vmul.f32 %v65, 1e+30
  %v82 = vmul.f32 %v66, 1e+30
  %v83 = vmul.f32 %v67, 1e+30
  %v84 = vmul.f32 %v68, 1e+30
  %v85 = vmul.f32 %v69, 1e+30
  %v86 = vmul.f32 %v70, 1e+30
  %v87 = vmul.f32 %v71, 1e+30
  %v88 = vmul.f32 %v72, 1e+30
  %v89 = vmul.f32 %v73, 1e+30
  %v90 = vmul.f32 %v74, 1e+30
  %v91 = vmul.f32 %v75, 1e+30
  %92 = vadd.xlane.f32.xlu0 %v44
  %v93 = vpop.xlane.xlu0 %92
  %94 = vadd.xlane.f32.xlu0 %v45
  %v95 = vpop.xlane.xlu0 %94
  %96 = vadd.xlane.f32.xlu0 %v46
  %v97 = vpop.xlane.xlu0 %96
  %98 = vadd.xlane.f32.xlu0 %v47
  %v99 = vpop.xlane.xlu0 %98
  %100 = vadd.xlane.f32.xlu0 %v48
  %v101 = vpop.xlane.xlu0 %100
  %102 = vadd.xlane.f32.xlu0 %v49
  %v103 = vpop.xlane.xlu0 %102
  %104 = vadd.xlane.f32.xlu0 %v50
  %v105 = vpop.xlane.xlu0 %104
  %106 = vadd.xlane.f32.xlu0 %v51
  %v107 = vpop.xlane.xlu0 %106
  %108 = vadd.xlane.f32.xlu0 %v52
  %v109 = vpop.xlane.xlu0 %108
  %110 = vadd.xlane.f32.xlu0 %v53
  %v111 = vpop.xlane.xlu0 %110
  %112 = vadd.xlane.f32.xlu0 %v54
  %v113 = vpop.xlane.xlu0 %112
  %114 = vadd.xlane.f32.xlu0 %v55
  %v115 = vpop.xlane.xlu0 %114
  %116 = vadd.xlane.f32.xlu0 %v56
  %v117 = vpop.xlane.xlu0 %116
  %118 = vadd.xlane.f32.xlu0 %v57
  %v119 = vpop.xlane.xlu0 %118
  %120 = vadd.xlane.f32.xlu0 %v58
  %v121 = vpop.xlane.xlu0 %120
  %122 = vadd.xlane.f32.xlu0 %v59
  %v123 = vpop.xlane.xlu0 %122
  %vm124 = vcmp.gt.f32.partialorder %v93, 0.0
  %vm125 = vcmp.gt.f32.partialorder %v95, 0.0
  %vm126 = vcmp.gt.f32.partialorder %v97, 0.0
  %vm127 = vcmp.gt.f32.partialorder %v99, 0.0
  %vm128 = vcmp.gt.f32.partialorder %v101, 0.0
  %vm129 = vcmp.gt.f32.partialorder %v103, 0.0
  %vm130 = vcmp.gt.f32.partialorder %v105, 0.0
  %vm131 = vcmp.gt.f32.partialorder %v107, 0.0
  %vm132 = vcmp.gt.f32.partialorder %v109, 0.0
  %vm133 = vcmp.gt.f32.partialorder %v111, 0.0
  %vm134 = vcmp.gt.f32.partialorder %v113, 0.0
  %vm135 = vcmp.gt.f32.partialorder %v115, 0.0
  %vm136 = vcmp.gt.f32.partialorder %v117, 0.0
  %vm137 = vcmp.gt.f32.partialorder %v119, 0.0
  %vm138 = vcmp.gt.f32.partialorder %v121, 0.0
  %vm139 = vcmp.gt.f32.partialorder %v123, 0.0
  %v140 = vsel %vm124, 1, 0
  %v141 = vsel %vm125, 1, 0
  %v142 = vsel %vm126, 1, 0
  %v143 = vsel %vm127, 1, 0
  %v144 = vsel %vm128, 1, 0
  %v145 = vsel %vm129, 1, 0
  %v146 = vsel %vm130, 1, 0
  %v147 = vsel %vm131, 1, 0
  %v148 = vsel %vm132, 1, 0
  %v149 = vsel %vm133, 1, 0
  %v150 = vsel %vm134, 1, 0
  %v151 = vsel %vm135, 1, 0
  %v152 = vsel %vm136, 1, 0
  %v153 = vsel %vm137, 1, 0
  %v154 = vsel %vm138, 1, 0
  %v155 = vsel %vm139, 1, 0
  %v156 = vcvt.s32.f32 %v140
  %v157 = vcvt.s32.f32 %v141
  %v158 = vcvt.s32.f32 %v142
  %v159 = vcvt.s32.f32 %v143
  %v160 = vcvt.s32.f32 %v144
  %v161 = vcvt.s32.f32 %v145
  %v162 = vcvt.s32.f32 %v146
  %v163 = vcvt.s32.f32 %v147
  %v164 = vcvt.s32.f32 %v148
  %v165 = vcvt.s32.f32 %v149
  %v166 = vcvt.s32.f32 %v150
  %v167 = vcvt.s32.f32 %v151
  %v168 = vcvt.s32.f32 %v152
  %v169 = vcvt.s32.f32 %v153
  %v170 = vcvt.s32.f32 %v154
  %v171 = vcvt.s32.f32 %v155
  %v172 = vld [vmem:[%s0] sm:$0xff]
  %v173 = vld [vmem:[%s0 + $0x8] sm:$0xff]
  %v174 = vld [vmem:[%s0 + $0x10] sm:$0xff]
  %v175 = vld [vmem:[%s0 + $0x18] sm:$0xff]
  %v176 = vld [vmem:[%s0 + $0x20] sm:$0xff]
  %v177 = vld [vmem:[%s0 + $0x28] sm:$0xff]
  %v178 = vld [vmem:[%s0 + $0x30] sm:$0xff]
  %v179 = vld [vmem:[%s0 + $0x38] sm:$0xff]
  %v180 = vld [vmem:[%s0 + $0x40] sm:$0xff]
  %v181 = vld [vmem:[%s0 + $0x48] sm:$0xff]
  %v182 = vld [vmem:[%s0 + $0x50] sm:$0xff]
  %v183 = vld [vmem:[%s0 + $0x58] sm:$0xff]
  %v184 = vld [vmem:[%s0 + $0x60] sm:$0xff]
  %v185 = vld [vmem:[%s0 + $0x68] sm:$0xff]
  %v186 = vld [vmem:[%s0 + $0x70] sm:$0xff]
  %v187 = vld [vmem:[%s0 + $0x78] sm:$0xff]
  %v188 = vpack.c.bf16 %v173, %v172
  %v189 = vpack.c.bf16 %v175, %v174
  %v190 = vpack.c.bf16 %v177, %v176
  %v191 = vpack.c.bf16 %v179, %v178
  %v192 = vpack.c.bf16 %v181, %v180
  %v193 = vpack.c.bf16 %v183, %v182
  %v194 = vpack.c.bf16 %v185, %v184
  %v195 = vpack.c.bf16 %v187, %v186
  %v196 = vld [vmem:[%s2] sm:$0xff]
  %v197 = vld [vmem:[%s2 + $0x8] sm:$0xff]
  %v198 = vld [vmem:[%s2 + $0x10] sm:$0xff]
  %v199 = vld [vmem:[%s2 + $0x18] sm:$0xff]
  %v200 = vld [vmem:[%s2 + $0x20] sm:$0xff]
  %v201 = vld [vmem:[%s2 + $0x28] sm:$0xff]
  %v202 = vld [vmem:[%s2 + $0x30] sm:$0xff]
  %v203 = vld [vmem:[%s2 + $0x38] sm:$0xff]
  %v204 = vld [vmem:[%s2 + $0x40] sm:$0xff]
  %v205 = vld [vmem:[%s2 + $0x48] sm:$0xff]
  %v206 = vld [vmem:[%s2 + $0x50] sm:$0xff]
  %v207 = vld [vmem:[%s2 + $0x58] sm:$0xff]
  %v208 = vld [vmem:[%s2 + $0x60] sm:$0xff]
  %v209 = vld [vmem:[%s2 + $0x68] sm:$0xff]
  %v210 = vld [vmem:[%s2 + $0x70] sm:$0xff]
  %v211 = vld [vmem:[%s2 + $0x78] sm:$0xff]
  %v228 = vunpack.c.l.b16 %v196
  %v229 = vunpack.c.h.b16 %v196
  %v230 = vunpack.c.l.b16 %v197
  %v231 = vunpack.c.h.b16 %v197
  %v232 = vunpack.c.l.b16 %v198
  %v233 = vunpack.c.h.b16 %v198
  %v234 = vunpack.c.l.b16 %v199
  %v235 = vunpack.c.h.b16 %v199
  %v236 = vunpack.c.l.b16 %v200
  %v237 = vunpack.c.h.b16 %v200
  %v238 = vunpack.c.l.b16 %v201
  %v239 = vunpack.c.h.b16 %v201
  %v240 = vunpack.c.l.b16 %v202
  %v241 = vunpack.c.h.b16 %v202
  %v242 = vunpack.c.l.b16 %v203
  %v243 = vunpack.c.h.b16 %v203
  %v244 = vunpack.c.l.b16 %v204
  %v245 = vunpack.c.h.b16 %v204
  %v246 = vunpack.c.l.b16 %v205
  %v247 = vunpack.c.h.b16 %v205
  %v248 = vunpack.c.l.b16 %v206
  %v249 = vunpack.c.h.b16 %v206
  %v250 = vunpack.c.l.b16 %v207
  %v251 = vunpack.c.h.b16 %v207
  %v252 = vunpack.c.l.b16 %v208
  %v253 = vunpack.c.h.b16 %v208
  %v254 = vunpack.c.l.b16 %v209
  %v255 = vunpack.c.h.b16 %v209
  %v256 = vunpack.c.l.b16 %v210
  %v257 = vunpack.c.h.b16 %v210
  %v258 = vunpack.c.l.b16 %v211
  %v259 = vunpack.c.h.b16 %v211
  %v260 = vpack.c.b16 %v230, %v228
  %v261 = vpack.c.b16 %v231, %v229
  %v262 = vpack.c.b16 %v234, %v232
  %v263 = vpack.c.b16 %v235, %v233
  %v264 = vpack.c.b16 %v238, %v236
  %v265 = vpack.c.b16 %v239, %v237
  %v266 = vpack.c.b16 %v242, %v240
  %v267 = vpack.c.b16 %v243, %v241
  %v268 = vpack.c.b16 %v246, %v244
  %v269 = vpack.c.b16 %v247, %v245
  %v270 = vpack.c.b16 %v250, %v248
  %v271 = vpack.c.b16 %v251, %v249
  %v272 = vpack.c.b16 %v254, %v252
  %v273 = vpack.c.b16 %v255, %v253
  %v274 = vpack.c.b16 %v258, %v256
  %v275 = vpack.c.b16 %v259, %v257
  %292 = vmatprep.subr.bf16.mxu0 %v261
  %293 = vmatpush1.bf16.msra.mxu0 %v260
  %294 = vmatprep.subr.bf16.mxu0 %v263
  %295 = vmatpush1.bf16.msra.mxu0 %v262
  %296 = vmatprep.subr.bf16.mxu0 %v265
  %297 = vmatpush1.bf16.msra.mxu0 %v264
  %298 = vmatprep.subr.bf16.mxu0 %v267
  %299 = vmatpush1.bf16.msra.mxu0 %v266
  %300 = vmatprep.subr.bf16.mxu0 %v269
  %301 = vmatpush1.bf16.msra.mxu0 %v268
  %302 = vmatprep.subr.bf16.mxu0 %v271
  %303 = vmatpush1.bf16.msra.mxu0 %v270
  %304 = vmatprep.subr.bf16.mxu0 %v273
  %305 = vmatpush1.bf16.msra.mxu0 %v272
  %306 = vmatprep.subr.bf16.mxu0 %v275
  %307 = vmatpush1.bf16.msra.mxu0 %v274
  %308 = vmatprep.subr.bf16.mxu0 0
  %309 = vmatpush1.bf16.msra.mxu0 0
  %310 = vmatprep.subr.bf16.mxu0 0
  %311 = vmatpush1.bf16.msra.mxu0 0
  %312 = vmatprep.subr.bf16.mxu0 0
  %313 = vmatpush1.bf16.msra.mxu0 0
  %314 = vmatprep.subr.bf16.mxu0 0
  %315 = vmatpush1.bf16.msra.mxu0 0
  %316 = vmatprep.subr.bf16.mxu0 0
  %317 = vmatpush1.bf16.msra.mxu0 0
  %318 = vmatprep.subr.bf16.mxu0 0
  %319 = vmatpush1.bf16.msra.mxu0 0
  %320 = vmatprep.subr.bf16.mxu0 0
  %321 = vmatpush1.bf16.msra.mxu0 0
  %322 = vmatprep.subr.bf16.mxu0 0
  %323 = vmatpush1.bf16.msra.mxu0 0
  %324 = vmatprep.mubr.bf16.mxu0 0
  %325 = vmatmul.mubr.bf16.gmra.mrb[0].mxu0 %v188
  %v326 = vpop.f32.mrb[0].mxu0
  %v327 = vadd.f32 0.0, %v326
  %v328 = vpop.f32.mrb[0].mxu0
  %v329 = vadd.f32 0.0, %v328
  %v330 = vpop.f32.mrb[0].mxu0
  %v331 = vadd.f32 0.0, %v330
  %v332 = vpop.f32.mrb[0].mxu0
  %v333 = vadd.f32 0.0, %v332
  %334 = vmatprep.mubr.bf16.mxu0 0
  %335 = vmatmul.mubr.bf16.gmra.mrb[0].mxu0 %v189
  %v336 = vpop.f32.mrb[0].mxu0
  %v337 = vadd.f32 0.0, %v336
  %v338 = vpop.f32.mrb[0].mxu0
  %v339 = vadd.f32 0.0, %v338
  %v340 = vpop.f32.mrb[0].mxu0
  %v341 = vadd.f32 0.0, %v340
  %v342 = vpop.f32.mrb[0].mxu0
  %v343 = vadd.f32 0.0, %v342
  %344 = vmatprep.mubr.bf16.mxu0 0
  %345 = vmatmul.mubr.bf16.gmra.mrb[0].mxu0 %v190
  %v346 = vpop.f32.mrb[0].mxu0
  %v347 = vadd.f32 0.0, %v346
  %v348 = vpop.f32.mrb[0].mxu0
  %v349 = vadd.f32 0.0, %v348
  %v350 = vpop.f32.mrb[0].mxu0
  %v351 = vadd.f32 0.0, %v350
  %v352 = vpop.f32.mrb[0].mxu0
  %v353 = vadd.f32 0.0, %v352
  %354 = vmatprep.mubr.bf16.mxu0 0
  %355 = vmatmul.mubr.bf16.gmra.mrb[0].mxu0 %v191
  %v356 = vpop.f32.mrb[0].mxu0
  %v357 = vadd.f32 0.0, %v356
  %v358 = vpop.f32.mrb[0].mxu0
  %v359 = vadd.f32 0.0, %v358
  %v360 = vpop.f32.mrb[0].mxu0
  %v361 = vadd.f32 0.0, %v360
  %v362 = vpop.f32.mrb[0].mxu0
  %v363 = vadd.f32 0.0, %v362
  %364 = vmatprep.mubr.bf16.mxu0 0
  %365 = vmatmul.mubr.bf16.gmra.mrb[0].mxu0 %v192
  %v366 = vpop.f32.mrb[0].mxu0
  %v367 = vadd.f32 0.0, %v366
  %v368 = vpop.f32.mrb[0].mxu0
  %v369 = vadd.f32 0.0, %v368
  %v370 = vpop.f32.mrb[0].mxu0
  %v371 = vadd.f32 0.0, %v370
  %v372 = vpop.f32.mrb[0].mxu0
  %v373 = vadd.f32 0.0, %v372
  %374 = vmatprep.mubr.bf16.mxu0 0
  %375 = vmatmul.mubr.bf16.gmra.mrb[0].mxu0 %v193
  %v376 = vpop.f32.mrb[0].mxu0
  %v377 = vadd.f32 0.0, %v376
  %v378 = vpop.f32.mrb[0].mxu0
  %v379 = vadd.f32 0.0, %v378
  %v380 = vpop.f32.mrb[0].mxu0
  %v381 = vadd.f32 0.0, %v380
  %v382 = vpop.f32.mrb[0].mxu0
  %v383 = vadd.f32 0.0, %v382
  %384 = vmatprep.mubr.bf16.mxu0 0
  %385 = vmatmul.mubr.bf16.gmra.mrb[0].mxu0 %v194
  %v386 = vpop.f32.mrb[0].mxu0
  %v387 = vadd.f32 0.0, %v386
  %v388 = vpop.f32.mrb[0].mxu0
  %v389 = vadd.f32 0.0, %v388
  %v390 = vpop.f32.mrb[0].mxu0
  %v391 = vadd.f32 0.0, %v390
  %v392 = vpop.f32.mrb[0].mxu0
  %v393 = vadd.f32 0.0, %v392
  %394 = vmatprep.mubr.bf16.mxu0 0
  %395 = vmatmul.mubr.bf16.gmra.mrb[0].mxu0 %v195
  %v396 = vpop.f32.mrb[0].mxu0
  %v397 = vadd.f32 0.0, %v396
  %v398 = vpop.f32.mrb[0].mxu0
  %v399 = vadd.f32 0.0, %v398
  %v400 = vpop.f32.mrb[0].mxu0
  %v401 = vadd.f32 0.0, %v400
  %v402 = vpop.f32.mrb[0].mxu0
  %v403 = vadd.f32 0.0, %v402
  %404 = vdwg.mxu0
  %v405 = vpack.c.bf16 %v331, %v327
  %v406 = vpack.c.bf16 %v341, %v337
  %v407 = vpack.c.bf16 %v351, %v347
  %v408 = vpack.c.bf16 %v361, %v357
  %v409 = vpack.c.bf16 %v371, %v367
  %v410 = vpack.c.bf16 %v381, %v377
  %v411 = vpack.c.bf16 %v391, %v387
  %v412 = vpack.c.bf16 %v401, %v397
  %429 = vrot.lane.b32.xlu0 %v327, 4
  %v430 = vpop.permute.xlu0 %429
  %431 = vrot.lane.b32.xlu0 %v331, 4
  %v432 = vpop.permute.xlu0 %431
  %433 = vrot.lane.b32.xlu0 %v337, 4
  %v434 = vpop.permute.xlu0 %433
  %435 = vrot.lane.b32.xlu0 %v341, 4
  %v436 = vpop.permute.xlu0 %435
  %437 = vrot.lane.b32.xlu0 %v347, 4
  %v438 = vpop.permute.xlu0 %437
  %439 = vrot.lane.b32.xlu0 %v351, 4
  %v440 = vpop.permute.xlu0 %439
  %441 = vrot.lane.b32.xlu0 %v357, 4
  %v442 = vpop.permute.xlu0 %441
  %443 = vrot.lane.b32.xlu0 %v361, 4
  %v444 = vpop.permute.xlu0 %443
  %445 = vrot.lane.b32.xlu0 %v367, 4
  %v446 = vpop.permute.xlu0 %445
  %447 = vrot.lane.b32.xlu0 %v371, 4
  %v448 = vpop.permute.xlu0 %447
  %449 = vrot.lane.b32.xlu0 %v377, 4
  %v450 = vpop.permute.xlu0 %449
  %451 = vrot.lane.b32.xlu0 %v381, 4
  %v452 = vpop.permute.xlu0 %451
  %453 = vrot.lane.b32.xlu0 %v387, 4
  %v454 = vpop.permute.xlu0 %453
  %455 = vrot.lane.b32.xlu0 %v391, 4
  %v456 = vpop.permute.xlu0 %455
  %457 = vrot.lane.b32.xlu0 %v397, 4
  %v458 = vpop.permute.xlu0 %457
  %459 = vrot.lane.b32.xlu0 %v401, 4
  %v460 = vpop.permute.xlu0 %459
  %477 = vxpose.xlu0.b32.start [1/16] %v430, 128
  %478 = vxpose.xlu0.b32.cont [2/16] %v432, 128
  %479 = vxpose.xlu0.b32.cont [3/16] %v434, 128
  %480 = vxpose.xlu0.b32.cont [4/16] %v436, 128
  %481 = vxpose.xlu0.b32.cont [5/16] %v438, 128
  %482 = vxpose.xlu0.b32.cont [6/16] %v440, 128
  %483 = vxpose.xlu0.b32.cont [7/16] %v442, 128
  %484 = vxpose.xlu0.b32.cont [8/16] %v444, 128
  %485 = vxpose.xlu0.b32.cont [9/16] %v446, 128
  %486 = vxpose.xlu0.b32.cont [10/16] %v448, 128
  %487 = vxpose.xlu0.b32.cont [11/16] %v450, 128
  %488 = vxpose.xlu0.b32.cont [12/16] %v452, 128
  %489 = vxpose.xlu0.b32.cont [13/16] %v454, 128
  %490 = vxpose.xlu0.b32.cont [14/16] %v456, 128
  %491 = vxpose.xlu0.b32.cont [15/16] %v458, 128
  %492 = vxpose.xlu0.b32.end [16/16] %v460, 128
  %v493 = vpop.trf.xlu0
  %v494 = vpop.trf.xlu0
  %v495 = vpop.trf.xlu0
  %v496 = vpop.trf.xlu0
  %v497 = vpop.trf.xlu0
  %v498 = vpop.trf.xlu0
  %v499 = vpop.trf.xlu0
  %v500 = vpop.trf.xlu0
  %v501 = vpop.trf.xlu0
  %v502 = vpop.trf.xlu0
  %v503 = vpop.trf.xlu0
  %v504 = vpop.trf.xlu0
  %v505 = vpop.trf.xlu0
  %v506 = vpop.trf.xlu0
  %v507 = vpop.trf.xlu0
  %v508 = vpop.trf.xlu0
  %509 = vset.pattern.permute.xlu0 125
  %510 = vperm.xlu0 %509, %v327
  %v511 = vpop.permute.xlu0 %510
  %513 = vset.pattern.permute.xlu0 125
  %514 = vperm.xlu0 %513, %v331
  %v515 = vpop.permute.xlu0 %514
  %517 = vset.pattern.permute.xlu0 125
  %518 = vperm.xlu0 %517, %v337
  %v519 = vpop.permute.xlu0 %518
  %521 = vset.pattern.permute.xlu0 125
  %522 = vperm.xlu0 %521, %v341
  %v523 = vpop.permute.xlu0 %522
  %525 = vset.pattern.permute.xlu0 125
  %526 = vperm.xlu0 %525, %v347
  %v527 = vpop.permute.xlu0 %526
  %529 = vset.pattern.permute.xlu0 125
  %530 = vperm.xlu0 %529, %v351
  %v531 = vpop.permute.xlu0 %530
  %533 = vset.pattern.permute.xlu0 125
  %534 = vperm.xlu0 %533, %v357
  %v535 = vpop.permute.xlu0 %534
  %537 = vset.pattern.permute.xlu0 125
  %538 = vperm.xlu0 %537, %v361
  %v539 = vpop.permute.xlu0 %538
  %541 = vset.pattern.permute.xlu0 125
  %542 = vperm.xlu0 %541, %v367
  %v543 = vpop.permute.xlu0 %542
  %545 = vset.pattern.permute.xlu0 125
  %546 = vperm.xlu0 %545, %v371
  %v547 = vpop.permute.xlu0 %546
  %549 = vset.pattern.permute.xlu0 125
  %550 = vperm.xlu0 %549, %v377
  %v551 = vpop.permute.xlu0 %550
  %553 = vset.pattern.permute.xlu0 125
  %554 = vperm.xlu0 %553, %v381
  %v555 = vpop.permute.xlu0 %554
  %557 = vset.pattern.permute.xlu0 125
  %558 = vperm.xlu0 %557, %v387
  %v559 = vpop.permute.xlu0 %558
  %561 = vset.pattern.permute.xlu0 125
  %562 = vperm.xlu0 %561, %v391
  %v563 = vpop.permute.xlu0 %562
  %565 = vset.pattern.permute.xlu0 125
  %566 = vperm.xlu0 %565, %v397
  %v567 = vpop.permute.xlu0 %566
  %569 = vset.pattern.permute.xlu0 125
  %570 = vperm.xlu0 %569, %v401
  %v571 = vpop.permute.xlu0 %570
  %v573 = vlaneseq
  %v574 = vshrl.u32 %v573, 7
  %v575 = vsub.s32 0, %v574
  %v576 = vrot.slane %v493, %v575
  %v577 = vadd.f32 %v511, %v576
  %v578 = vadd.f32 %v515, %v576
  %v579 = vadd.f32 %v519, %v576
  %v580 = vadd.f32 %v523, %v576
  %v581 = vadd.f32 %v527, %v576
  %v582 = vadd.f32 %v531, %v576
  %v583 = vadd.f32 %v535, %v576
  %v584 = vadd.f32 %v539, %v576
  %v585 = vadd.f32 %v543, %v576
  %v586 = vadd.f32 %v547, %v576
  %v587 = vadd.f32 %v551, %v576
  %v588 = vadd.f32 %v555, %v576
  %v589 = vadd.f32 %v559, %v576
  %v590 = vadd.f32 %v563, %v576
  %v591 = vadd.f32 %v567, %v576
  %v592 = vadd.f32 %v571, %v576
  %v593 = vmul.f32 %v577, 0.6
  %v594 = vmul.f32 %v578, 0.6
  %v595 = vmul.f32 %v579, 0.6
  %v596 = vmul.f32 %v580, 0.6
  %v597 = vmul.f32 %v581, 0.6
  %v598 = vmul.f32 %v582, 0.6
  %v599 = vmul.f32 %v583, 0.6
  %v600 = vmul.f32 %v584, 0.6
  %v601 = vmul.f32 %v585, 0.6
  %v602 = vmul.f32 %v586, 0.6
  %v603 = vmul.f32 %v587, 0.6
  %v604 = vmul.f32 %v588, 0.6
  %v605 = vmul.f32 %v589, 0.6
  %v606 = vmul.f32 %v590, 0.6
  %v607 = vmul.f32 %v591, 0.6
  %v608 = vmul.f32 %v592, 0.6
  %v609 = vand.u32 2147483647, %v577
  %v610 = vand.u32 2147483647, %v578
  %v611 = vand.u32 2147483647, %v579
  %v612 = vand.u32 2147483647, %v580
  %v613 = vand.u32 2147483647, %v581
  %v614 = vand.u32 2147483647, %v582
  %v615 = vand.u32 2147483647, %v583
  %v616 = vand.u32 2147483647, %v584
  %v617 = vand.u32 2147483647, %v585
  %v618 = vand.u32 2147483647, %v586
  %v619 = vand.u32 2147483647, %v587
  %v620 = vand.u32 2147483647, %v588
  %v621 = vand.u32 2147483647, %v589
  %v622 = vand.u32 2147483647, %v590
  %v623 = vand.u32 2147483647, %v591
  %v624 = vand.u32 2147483647, %v592
  %v625 = vmul.f32 %v609, 0.4
  %v626 = vmul.f32 %v610, 0.4
  %v627 = vmul.f32 %v611, 0.4
  %v628 = vmul.f32 %v612, 0.4
  %v629 = vmul.f32 %v613, 0.4
  %v630 = vmul.f32 %v614, 0.4
  %v631 = vmul.f32 %v615, 0.4
  %v632 = vmul.f32 %v616, 0.4
  %v633 = vmul.f32 %v617, 0.4
  %v634 = vmul.f32 %v618, 0.4
  %v635 = vmul.f32 %v619, 0.4
  %v636 = vmul.f32 %v620, 0.4
  %v637 = vmul.f32 %v621, 0.4
  %v638 = vmul.f32 %v622, 0.4
  %v639 = vmul.f32 %v623, 0.4
  %v640 = vmul.f32 %v624, 0.4
  %v641 = vadd.f32 %v593, %v625
  %v642 = vadd.f32 %v594, %v626
  %v643 = vadd.f32 %v595, %v627
  %v644 = vadd.f32 %v596, %v628
  %v645 = vadd.f32 %v597, %v629
  %v646 = vadd.f32 %v598, %v630
  %v647 = vadd.f32 %v599, %v631
  %v648 = vadd.f32 %v600, %v632
  %v649 = vadd.f32 %v601, %v633
  %v650 = vadd.f32 %v602, %v634
  %v651 = vadd.f32 %v603, %v635
  %v652 = vadd.f32 %v604, %v636
  %v653 = vadd.f32 %v605, %v637
  %v654 = vadd.f32 %v606, %v638
  %v655 = vadd.f32 %v607, %v639
  %v656 = vadd.f32 %v608, %v640
  %v657 = vadd.f32 %v641, %v76
  %v658 = vadd.f32 %v642, %v77
  %v659 = vadd.f32 %v643, %v78
  %v660 = vadd.f32 %v644, %v79
  %v661 = vadd.f32 %v645, %v80
  %v662 = vadd.f32 %v646, %v81
  %v663 = vadd.f32 %v647, %v82
  %v664 = vadd.f32 %v648, %v83
  %v665 = vadd.f32 %v649, %v84
  %v666 = vadd.f32 %v650, %v85
  %v667 = vadd.f32 %v651, %v86
  %v668 = vadd.f32 %v652, %v87
  %v669 = vadd.f32 %v653, %v88
  %v670 = vadd.f32 %v654, %v89
  %v671 = vadd.f32 %v655, %v90
  %v672 = vadd.f32 %v656, %v91
  %673 = vmax.xlane.f32.xlu0 %v657
  %v674 = vpop.xlane.xlu0 %673
  %675 = vmax.xlane.f32.xlu0 %v658
  %v676 = vpop.xlane.xlu0 %675
  %677 = vmax.xlane.f32.xlu0 %v659
  %v678 = vpop.xlane.xlu0 %677
  %679 = vmax.xlane.f32.xlu0 %v660
  %v680 = vpop.xlane.xlu0 %679
  %681 = vmax.xlane.f32.xlu0 %v661
  %v682 = vpop.xlane.xlu0 %681
  %683 = vmax.xlane.f32.xlu0 %v662
  %v684 = vpop.xlane.xlu0 %683
  %685 = vmax.xlane.f32.xlu0 %v663
  %v686 = vpop.xlane.xlu0 %685
  %687 = vmax.xlane.f32.xlu0 %v664
  %v688 = vpop.xlane.xlu0 %687
  %689 = vmax.xlane.f32.xlu0 %v665
  %v690 = vpop.xlane.xlu0 %689
  %691 = vmax.xlane.f32.xlu0 %v666
  %v692 = vpop.xlane.xlu0 %691
  %693 = vmax.xlane.f32.xlu0 %v667
  %v694 = vpop.xlane.xlu0 %693
  %695 = vmax.xlane.f32.xlu0 %v668
  %v696 = vpop.xlane.xlu0 %695
  %697 = vmax.xlane.f32.xlu0 %v669
  %v698 = vpop.xlane.xlu0 %697
  %699 = vmax.xlane.f32.xlu0 %v670
  %v700 = vpop.xlane.xlu0 %699
  %701 = vmax.xlane.f32.xlu0 %v671
  %v702 = vpop.xlane.xlu0 %701
  %703 = vmax.xlane.f32.xlu0 %v672
  %v704 = vpop.xlane.xlu0 %703
  %v705 = vsub.f32 %v657, %v674
  %v706 = vsub.f32 %v658, %v676
  %v707 = vsub.f32 %v659, %v678
  %v708 = vsub.f32 %v660, %v680
  %v709 = vsub.f32 %v661, %v682
  %v710 = vsub.f32 %v662, %v684
  %v711 = vsub.f32 %v663, %v686
  %v712 = vsub.f32 %v664, %v688
  %v713 = vsub.f32 %v665, %v690
  %v714 = vsub.f32 %v666, %v692
  %v715 = vsub.f32 %v667, %v694
  %v716 = vsub.f32 %v668, %v696
  %v717 = vsub.f32 %v669, %v698
  %v718 = vsub.f32 %v670, %v700
  %v719 = vsub.f32 %v671, %v702
  %v720 = vsub.f32 %v672, %v704
  %v721 = vmul.f32 %v705, 1.442695
  %v722 = vpow.pop %v721
  %v723 = vmul.f32 %v706, 1.442695
  %v724 = vpow.pop %v723
  %v725 = vmul.f32 %v707, 1.442695
  %v726 = vpow.pop %v725
  %v727 = vmul.f32 %v708, 1.442695
  %v728 = vpow.pop %v727
  %v729 = vmul.f32 %v709, 1.442695
  %v730 = vpow.pop %v729
  %v731 = vmul.f32 %v710, 1.442695
  %v732 = vpow.pop %v731
  %v733 = vmul.f32 %v711, 1.442695
  %v734 = vpow.pop %v733
  %v735 = vmul.f32 %v712, 1.442695
  %v736 = vpow.pop %v735
  %v737 = vmul.f32 %v713, 1.442695
  %v738 = vpow.pop %v737
  %v739 = vmul.f32 %v714, 1.442695
  %v740 = vpow.pop %v739
  %v741 = vmul.f32 %v715, 1.442695
  %v742 = vpow.pop %v741
  %v743 = vmul.f32 %v716, 1.442695
  %v744 = vpow.pop %v743
  %v745 = vmul.f32 %v717, 1.442695
  %v746 = vpow.pop %v745
  %v747 = vmul.f32 %v718, 1.442695
  %v748 = vpow.pop %v747
  %v749 = vmul.f32 %v719, 1.442695
  %v750 = vpow.pop %v749
  %v751 = vmul.f32 %v720, 1.442695
  %v752 = vpow.pop %v751
  %v753 = vpack.c.bf16 %v724, %v722
  %v754 = vpack.c.bf16 %v728, %v726
  %v755 = vpack.c.bf16 %v732, %v730
  %v756 = vpack.c.bf16 %v736, %v734
  %v757 = vpack.c.bf16 %v740, %v738
  %v758 = vpack.c.bf16 %v744, %v742
  %v759 = vpack.c.bf16 %v748, %v746
  %v760 = vpack.c.bf16 %v752, %v750
  %761 = vmatprep.subr.bf16.mxu0 0
  %762 = vmatpush1.bf16.msra.mxu0 %v405
  %763 = vmatprep.subr.bf16.mxu0 0
  %764 = vmatpush1.bf16.msra.mxu0 %v406
  %765 = vmatprep.subr.bf16.mxu0 0
  %766 = vmatpush1.bf16.msra.mxu0 %v407
  %767 = vmatprep.subr.bf16.mxu0 0
  %768 = vmatpush1.bf16.msra.mxu0 %v408
  %769 = vmatprep.subr.bf16.mxu0 0
  %770 = vmatpush1.bf16.msra.mxu0 %v409
  %771 = vmatprep.subr.bf16.mxu0 0
  %772 = vmatpush1.bf16.msra.mxu0 %v410
  %773 = vmatprep.subr.bf16.mxu0 0
  %774 = vmatpush1.bf16.msra.mxu0 %v411
  %775 = vmatprep.subr.bf16.mxu0 0
  %776 = vmatpush1.bf16.msra.mxu0 %v412
  %777 = vmatprep.subr.bf16.mxu0 0
  %778 = vmatpush1.bf16.msra.mxu0 0
  %779 = vmatprep.subr.bf16.mxu0 0
  %780 = vmatpush1.bf16.msra.mxu0 0
  %781 = vmatprep.subr.bf16.mxu0 0
  %782 = vmatpush1.bf16.msra.mxu0 0
  %783 = vmatprep.subr.bf16.mxu0 0
  %784 = vmatpush1.bf16.msra.mxu0 0
  %785 = vmatprep.subr.bf16.mxu0 0
  %786 = vmatpush1.bf16.msra.mxu0 0
  %787 = vmatprep.subr.bf16.mxu0 0
  %788 = vmatpush1.bf16.msra.mxu0 0
  %789 = vmatprep.subr.bf16.mxu0 0
  %790 = vmatpush1.bf16.msra.mxu0 0
  %791 = vmatprep.subr.bf16.mxu0 0
  %792 = vmatpush1.bf16.msra.mxu0 0
  %793 = vmatprep.mubr.bf16.mxu0 0
  %794 = vmatmul.mubr.bf16.gmra.mrb[0].mxu0 %v753
  %v795 = vpop.f32.mrb[0].mxu0
  %v796 = vadd.f32 0.0, %v795
  %v797 = vpop.f32.mrb[0].mxu0
  %v798 = vpop.f32.mrb[0].mxu0
  %v799 = vadd.f32 0.0, %v798
  %v800 = vpop.f32.mrb[0].mxu0
  %801 = vmatprep.mubr.bf16.mxu0 0
  %802 = vmatmul.mubr.bf16.gmra.mrb[0].mxu0 %v754
  %v803 = vpop.f32.mrb[0].mxu0
  %v804 = vadd.f32 0.0, %v803
  %v805 = vpop.f32.mrb[0].mxu0
  %v806 = vpop.f32.mrb[0].mxu0
  %v807 = vadd.f32 0.0, %v806
  %v808 = vpop.f32.mrb[0].mxu0
  %809 = vmatprep.mubr.bf16.mxu0 0
  %810 = vmatmul.mubr.bf16.gmra.mrb[0].mxu0 %v755
  %v811 = vpop.f32.mrb[0].mxu0
  %v812 = vadd.f32 0.0, %v811
  %v813 = vpop.f32.mrb[0].mxu0
  %v814 = vpop.f32.mrb[0].mxu0
  %v815 = vadd.f32 0.0, %v814
  %v816 = vpop.f32.mrb[0].mxu0
  %817 = vmatprep.mubr.bf16.mxu0 0
  %818 = vmatmul.mubr.bf16.gmra.mrb[0].mxu0 %v756
  %v819 = vpop.f32.mrb[0].mxu0
  %v820 = vadd.f32 0.0, %v819
  %v821 = vpop.f32.mrb[0].mxu0
  %v822 = vpop.f32.mrb[0].mxu0
  %v823 = vadd.f32 0.0, %v822
  %v824 = vpop.f32.mrb[0].mxu0
  %825 = vmatprep.mubr.bf16.mxu0 0
  %826 = vmatmul.mubr.bf16.gmra.mrb[0].mxu0 %v757
  %v827 = vpop.f32.mrb[0].mxu0
  %v828 = vadd.f32 0.0, %v827
  %v829 = vpop.f32.mrb[0].mxu0
  %v830 = vpop.f32.mrb[0].mxu0
  %v831 = vadd.f32 0.0, %v830
  %v832 = vpop.f32.mrb[0].mxu0
  %833 = vmatprep.mubr.bf16.mxu0 0
  %834 = vmatmul.mubr.bf16.gmra.mrb[0].mxu0 %v758
  %v835 = vpop.f32.mrb[0].mxu0
  %v836 = vadd.f32 0.0, %v835
  %v837 = vpop.f32.mrb[0].mxu0
  %v838 = vpop.f32.mrb[0].mxu0
  %v839 = vadd.f32 0.0, %v838
  %v840 = vpop.f32.mrb[0].mxu0
  %841 = vmatprep.mubr.bf16.mxu0 0
  %842 = vmatmul.mubr.bf16.gmra.mrb[0].mxu0 %v759
  %v843 = vpop.f32.mrb[0].mxu0
  %v844 = vadd.f32 0.0, %v843
  %v845 = vpop.f32.mrb[0].mxu0
  %v846 = vpop.f32.mrb[0].mxu0
  %v847 = vadd.f32 0.0, %v846
  %v848 = vpop.f32.mrb[0].mxu0
  %849 = vmatprep.mubr.bf16.mxu0 0
  %850 = vmatmul.mubr.bf16.gmra.mrb[0].mxu0 %v760
  %v851 = vpop.f32.mrb[0].mxu0
  %v852 = vadd.f32 0.0, %v851
  %v853 = vpop.f32.mrb[0].mxu0
  %v854 = vpop.f32.mrb[0].mxu0
  %v855 = vadd.f32 0.0, %v854
  %v856 = vpop.f32.mrb[0].mxu0
  %857 = vdwg.mxu0
  %vm858 = vcmp.gt.f32.partialorder %v796, 0.0
  %vm859 = vcmp.gt.f32.partialorder %v799, 0.0
  %vm860 = vcmp.gt.f32.partialorder %v804, 0.0
  %vm861 = vcmp.gt.f32.partialorder %v807, 0.0
  %vm862 = vcmp.gt.f32.partialorder %v812, 0.0
  %vm863 = vcmp.gt.f32.partialorder %v815, 0.0
  %vm864 = vcmp.gt.f32.partialorder %v820, 0.0
  %vm865 = vcmp.gt.f32.partialorder %v823, 0.0
  %vm866 = vcmp.gt.f32.partialorder %v828, 0.0
  %vm867 = vcmp.gt.f32.partialorder %v831, 0.0
  %vm868 = vcmp.gt.f32.partialorder %v836, 0.0
  %vm869 = vcmp.gt.f32.partialorder %v839, 0.0
  %vm870 = vcmp.gt.f32.partialorder %v844, 0.0
  %vm871 = vcmp.gt.f32.partialorder %v847, 0.0
  %vm872 = vcmp.gt.f32.partialorder %v852, 0.0
  %vm873 = vcmp.gt.f32.partialorder %v855, 0.0
  %v874 = vsel %vm858, %v796, 1.0
  %v875 = vsel %vm859, %v799, 1.0
  %v876 = vsel %vm860, %v804, 1.0
  %v877 = vsel %vm861, %v807, 1.0
  %v878 = vsel %vm862, %v812, 1.0
  %v879 = vsel %vm863, %v815, 1.0
  %v880 = vsel %vm864, %v820, 1.0
  %v881 = vsel %vm865, %v823, 1.0
  %v882 = vsel %vm866, %v828, 1.0
  %v883 = vsel %vm867, %v831, 1.0
  %v884 = vsel %vm868, %v836, 1.0
  %v885 = vsel %vm869, %v839, 1.0
  %v886 = vsel %vm870, %v844, 1.0
  %v887 = vsel %vm871, %v847, 1.0
  %v888 = vsel %vm872, %v852, 1.0
  %v889 = vsel %vm873, %v855, 1.0
  %v890 = vrcp.pop %v874
  %v891 = vrcp.pop %v875
  %v892 = vrcp.pop %v876
  %v893 = vrcp.pop %v877
  %v894 = vrcp.pop %v878
  %v895 = vrcp.pop %v879
  %v896 = vrcp.pop %v880
  %v897 = vrcp.pop %v881
  %v898 = vrcp.pop %v882
  %v899 = vrcp.pop %v883
  %v900 = vrcp.pop %v884
  %v901 = vrcp.pop %v885
  %v902 = vrcp.pop %v886
  %v903 = vrcp.pop %v887
  %v904 = vrcp.pop %v888
  %v905 = vrcp.pop %v889
  %v906 = vmul.f32 %v890, %v156
  %v907 = vmul.f32 %v891, %v157
  %v908 = vmul.f32 %v892, %v158
  %v909 = vmul.f32 %v893, %v159
  %v910 = vmul.f32 %v894, %v160
  %v911 = vmul.f32 %v895, %v161
  %v912 = vmul.f32 %v896, %v162
  %v913 = vmul.f32 %v897, %v163
  %v914 = vmul.f32 %v898, %v164
  %v915 = vmul.f32 %v899, %v165
  %v916 = vmul.f32 %v900, %v166
  %v917 = vmul.f32 %v901, %v167
  %v918 = vmul.f32 %v902, %v168
  %v919 = vmul.f32 %v903, %v169
  %v920 = vmul.f32 %v904, %v170
  %v921 = vmul.f32 %v905, %v171
  %923 = vset.pattern.permute.xlu0 126
  %924 = vperm.xlu0 %923, %v906
  %v925 = vpop.permute.xlu0 %924
  %928 = vset.pattern.permute.xlu0 126
  %929 = vperm.xlu0 %928, %v907
  %v930 = vpop.permute.xlu0 %929
  %933 = vset.pattern.permute.xlu0 126
  %934 = vperm.xlu0 %933, %v908
  %v935 = vpop.permute.xlu0 %934
  %938 = vset.pattern.permute.xlu0 126
  %939 = vperm.xlu0 %938, %v909
  %v940 = vpop.permute.xlu0 %939
  %943 = vset.pattern.permute.xlu0 126
  %944 = vperm.xlu0 %943, %v910
  %v945 = vpop.permute.xlu0 %944
  %948 = vset.pattern.permute.xlu0 126
  %949 = vperm.xlu0 %948, %v911
  %v950 = vpop.permute.xlu0 %949
  %953 = vset.pattern.permute.xlu0 126
  %954 = vperm.xlu0 %953, %v912
  %v955 = vpop.permute.xlu0 %954
  %958 = vset.pattern.permute.xlu0 126
  %959 = vperm.xlu0 %958, %v913
  %v960 = vpop.permute.xlu0 %959
  %963 = vset.pattern.permute.xlu0 126
  %964 = vperm.xlu0 %963, %v914
  %v965 = vpop.permute.xlu0 %964
  %968 = vset.pattern.permute.xlu0 126
  %969 = vperm.xlu0 %968, %v915
  %v970 = vpop.permute.xlu0 %969
  %973 = vset.pattern.permute.xlu0 126
  %974 = vperm.xlu0 %973, %v916
  %v975 = vpop.permute.xlu0 %974
  %978 = vset.pattern.permute.xlu0 126
  %979 = vperm.xlu0 %978, %v917
  %v980 = vpop.permute.xlu0 %979
  %983 = vset.pattern.permute.xlu0 126
  %984 = vperm.xlu0 %983, %v918
  %v985 = vpop.permute.xlu0 %984
  %988 = vset.pattern.permute.xlu0 126
  %989 = vperm.xlu0 %988, %v919
  %v990 = vpop.permute.xlu0 %989
  %993 = vset.pattern.permute.xlu0 126
  %994 = vperm.xlu0 %993, %v920
  %v995 = vpop.permute.xlu0 %994
  %998 = vset.pattern.permute.xlu0 126
  %999 = vperm.xlu0 %998, %v921
  %v1000 = vpop.permute.xlu0 %999
  %v1002 = vmul.f32 %v796, %v925
  %v1003 = vmul.f32 %v799, %v930
  %v1004 = vmul.f32 %v804, %v935
  %v1005 = vmul.f32 %v807, %v940
  %v1006 = vmul.f32 %v812, %v945
  %v1007 = vmul.f32 %v815, %v950
  %v1008 = vmul.f32 %v820, %v955
  %v1009 = vmul.f32 %v823, %v960
  %v1010 = vmul.f32 %v828, %v965
  %v1011 = vmul.f32 %v831, %v970
  %v1012 = vmul.f32 %v836, %v975
  %v1013 = vmul.f32 %v839, %v980
  %v1014 = vmul.f32 %v844, %v985
  %v1015 = vmul.f32 %v847, %v990
  %v1016 = vmul.f32 %v852, %v995
  %v1017 = vmul.f32 %v855, %v1000
  %v1018 = vadd.f32 %v1002, %v329
  %v1019 = vadd.f32 %v1003, %v333
  %v1020 = vadd.f32 %v1004, %v339
  %v1021 = vadd.f32 %v1005, %v343
  %v1022 = vadd.f32 %v1006, %v349
  %v1023 = vadd.f32 %v1007, %v353
  %v1024 = vadd.f32 %v1008, %v359
  %v1025 = vadd.f32 %v1009, %v363
  %v1026 = vadd.f32 %v1010, %v369
  %v1027 = vadd.f32 %v1011, %v373
  %v1028 = vadd.f32 %v1012, %v379
  %v1029 = vadd.f32 %v1013, %v383
  %v1030 = vadd.f32 %v1014, %v389
  %v1031 = vadd.f32 %v1015, %v393
  %v1032 = vadd.f32 %v1016, %v399
  %v1033 = vadd.f32 %v1017, %v403
  %v1034 = vld [vmem:[%s3] sm:$0x1]
  %v1036 = vlaneseq
  %v1037 = vshrl.u32 %v1036, 7
  %v1038 = vsub.s32 0, %v1037
  %v1039 = vrot.slane %v1034, %v1038
  %v1041 = vadd.f32 %v1018, %v1039
  %v1042 = vadd.f32 %v1019, %v1039
  %v1043 = vadd.f32 %v1020, %v1039
  %v1044 = vadd.f32 %v1021, %v1039
  %v1045 = vadd.f32 %v1022, %v1039
  %v1046 = vadd.f32 %v1023, %v1039
  %v1047 = vadd.f32 %v1024, %v1039
  %v1048 = vadd.f32 %v1025, %v1039
  %v1049 = vadd.f32 %v1026, %v1039
  %v1050 = vadd.f32 %v1027, %v1039
  %v1051 = vadd.f32 %v1028, %v1039
  %v1052 = vadd.f32 %v1029, %v1039
  %v1053 = vadd.f32 %v1030, %v1039
  %v1054 = vadd.f32 %v1031, %v1039
  %v1055 = vadd.f32 %v1032, %v1039
  %v1056 = vadd.f32 %v1033, %v1039
  %v1057 = vmax.f32 %v1041, 0.0
  %v1058 = vmax.f32 %v1042, 0.0
  %v1059 = vmax.f32 %v1043, 0.0
  %v1060 = vmax.f32 %v1044, 0.0
  %v1061 = vmax.f32 %v1045, 0.0
  %v1062 = vmax.f32 %v1046, 0.0
  %v1063 = vmax.f32 %v1047, 0.0
  %v1064 = vmax.f32 %v1048, 0.0
  %v1065 = vmax.f32 %v1049, 0.0
  %v1066 = vmax.f32 %v1050, 0.0
  %v1067 = vmax.f32 %v1051, 0.0
  %v1068 = vmax.f32 %v1052, 0.0
  %v1069 = vmax.f32 %v1053, 0.0
  %v1070 = vmax.f32 %v1054, 0.0
  %v1071 = vmax.f32 %v1055, 0.0
  %v1072 = vmax.f32 %v1056, 0.0
  %v1073 = vpack.c.bf16 %v1058, %v1057
  %v1074 = vpack.c.bf16 %v1060, %v1059
  %v1075 = vpack.c.bf16 %v1062, %v1061
  %v1076 = vpack.c.bf16 %v1064, %v1063
  %v1077 = vpack.c.bf16 %v1066, %v1065
  %v1078 = vpack.c.bf16 %v1068, %v1067
  %v1079 = vpack.c.bf16 %v1070, %v1069
  %v1080 = vpack.c.bf16 %v1072, %v1071
  %v1081 = vld [vmem:[%s4] sm:$0xff]
  %v1082 = vld [vmem:[%s4 + $0x8] sm:$0xff]
  %v1083 = vld [vmem:[%s4 + $0x10] sm:$0xff]
  %v1084 = vld [vmem:[%s4 + $0x18] sm:$0xff]
  %v1085 = vld [vmem:[%s4 + $0x20] sm:$0xff]
  %v1086 = vld [vmem:[%s4 + $0x28] sm:$0xff]
  %v1087 = vld [vmem:[%s4 + $0x30] sm:$0xff]
  %v1088 = vld [vmem:[%s4 + $0x38] sm:$0xff]
  %v1089 = vld [vmem:[%s4 + $0x40] sm:$0xff]
  %v1090 = vld [vmem:[%s4 + $0x48] sm:$0xff]
  %v1091 = vld [vmem:[%s4 + $0x50] sm:$0xff]
  %v1092 = vld [vmem:[%s4 + $0x58] sm:$0xff]
  %v1093 = vld [vmem:[%s4 + $0x60] sm:$0xff]
  %v1094 = vld [vmem:[%s4 + $0x68] sm:$0xff]
  %v1095 = vld [vmem:[%s4 + $0x70] sm:$0xff]
  %v1096 = vld [vmem:[%s4 + $0x78] sm:$0xff]
  %v1113 = vunpack.c.l.b16 %v1081
  %v1114 = vunpack.c.h.b16 %v1081
  %v1115 = vunpack.c.l.b16 %v1082
  %v1116 = vunpack.c.h.b16 %v1082
  %v1117 = vunpack.c.l.b16 %v1083
  %v1118 = vunpack.c.h.b16 %v1083
  %v1119 = vunpack.c.l.b16 %v1084
  %v1120 = vunpack.c.h.b16 %v1084
  %v1121 = vunpack.c.l.b16 %v1085
  %v1122 = vunpack.c.h.b16 %v1085
  %v1123 = vunpack.c.l.b16 %v1086
  %v1124 = vunpack.c.h.b16 %v1086
  %v1125 = vunpack.c.l.b16 %v1087
  %v1126 = vunpack.c.h.b16 %v1087
  %v1127 = vunpack.c.l.b16 %v1088
  %v1128 = vunpack.c.h.b16 %v1088
  %v1129 = vunpack.c.l.b16 %v1089
  %v1130 = vunpack.c.h.b16 %v1089
  %v1131 = vunpack.c.l.b16 %v1090
  %v1132 = vunpack.c.h.b16 %v1090
  %v1133 = vunpack.c.l.b16 %v1091
  %v1134 = vunpack.c.h.b16 %v1091
  %v1135 = vunpack.c.l.b16 %v1092
  %v1136 = vunpack.c.h.b16 %v1092
  %v1137 = vunpack.c.l.b16 %v1093
  %v1138 = vunpack.c.h.b16 %v1093
  %v1139 = vunpack.c.l.b16 %v1094
  %v1140 = vunpack.c.h.b16 %v1094
  %v1141 = vunpack.c.l.b16 %v1095
  %v1142 = vunpack.c.h.b16 %v1095
  %v1143 = vunpack.c.l.b16 %v1096
  %v1144 = vunpack.c.h.b16 %v1096
  %v1145 = vpack.c.b16 %v1115, %v1113
  %v1146 = vpack.c.b16 %v1116, %v1114
  %v1147 = vpack.c.b16 %v1119, %v1117
  %v1148 = vpack.c.b16 %v1120, %v1118
  %v1149 = vpack.c.b16 %v1123, %v1121
  %v1150 = vpack.c.b16 %v1124, %v1122
  %v1151 = vpack.c.b16 %v1127, %v1125
  %v1152 = vpack.c.b16 %v1128, %v1126
  %v1153 = vpack.c.b16 %v1131, %v1129
  %v1154 = vpack.c.b16 %v1132, %v1130
  %v1155 = vpack.c.b16 %v1135, %v1133
  %v1156 = vpack.c.b16 %v1136, %v1134
  %v1157 = vpack.c.b16 %v1139, %v1137
  %v1158 = vpack.c.b16 %v1140, %v1138
  %v1159 = vpack.c.b16 %v1143, %v1141
  %v1160 = vpack.c.b16 %v1144, %v1142
  %1177 = vmatprep.subr.bf16.mxu0 %v1146
  %1178 = vmatpush1.bf16.msra.mxu0 %v1145
  %1179 = vmatprep.subr.bf16.mxu0 %v1148
  %1180 = vmatpush1.bf16.msra.mxu0 %v1147
  %1181 = vmatprep.subr.bf16.mxu0 %v1150
  %1182 = vmatpush1.bf16.msra.mxu0 %v1149
  %1183 = vmatprep.subr.bf16.mxu0 %v1152
  %1184 = vmatpush1.bf16.msra.mxu0 %v1151
  %1185 = vmatprep.subr.bf16.mxu0 %v1154
  %1186 = vmatpush1.bf16.msra.mxu0 %v1153
  %1187 = vmatprep.subr.bf16.mxu0 %v1156
  %1188 = vmatpush1.bf16.msra.mxu0 %v1155
  %1189 = vmatprep.subr.bf16.mxu0 %v1158
  %1190 = vmatpush1.bf16.msra.mxu0 %v1157
  %1191 = vmatprep.subr.bf16.mxu0 %v1160
  %1192 = vmatpush1.bf16.msra.mxu0 %v1159
  %1193 = vmatprep.subr.bf16.mxu0 0
  %1194 = vmatpush1.bf16.msra.mxu0 0
  %1195 = vmatprep.subr.bf16.mxu0 0
  %1196 = vmatpush1.bf16.msra.mxu0 0
  %1197 = vmatprep.subr.bf16.mxu0 0
  %1198 = vmatpush1.bf16.msra.mxu0 0
  %1199 = vmatprep.subr.bf16.mxu0 0
  %1200 = vmatpush1.bf16.msra.mxu0 0
  %1201 = vmatprep.subr.bf16.mxu0 0
  %1202 = vmatpush1.bf16.msra.mxu0 0
  %1203 = vmatprep.subr.bf16.mxu0 0
  %1204 = vmatpush1.bf16.msra.mxu0 0
  %1205 = vmatprep.subr.bf16.mxu0 0
  %1206 = vmatpush1.bf16.msra.mxu0 0
  %1207 = vmatprep.subr.bf16.mxu0 0
  %1208 = vmatpush1.bf16.msra.mxu0 0
  %1209 = vmatprep.mubr.bf16.mxu0 0
  %1210 = vmatmul.mubr.bf16.gmra.mrb[0].mxu0 %v1073
  %v1211 = vpop.f32.mrb[0].mxu0
  %v1212 = vadd.f32 0.0, %v1211
  %v1213 = vpop.f32.mrb[0].mxu0
  %v1214 = vadd.f32 0.0, %v1213
  %v1215 = vpop.f32.mrb[0].mxu0
  %v1216 = vadd.f32 0.0, %v1215
  %v1217 = vpop.f32.mrb[0].mxu0
  %v1218 = vadd.f32 0.0, %v1217
  %1219 = vmatprep.mubr.bf16.mxu0 0
  %1220 = vmatmul.mubr.bf16.gmra.mrb[0].mxu0 %v1074
  %v1221 = vpop.f32.mrb[0].mxu0
  %v1222 = vadd.f32 0.0, %v1221
  %v1223 = vpop.f32.mrb[0].mxu0
  %v1224 = vadd.f32 0.0, %v1223
  %v1225 = vpop.f32.mrb[0].mxu0
  %v1226 = vadd.f32 0.0, %v1225
  %v1227 = vpop.f32.mrb[0].mxu0
  %v1228 = vadd.f32 0.0, %v1227
  %1229 = vmatprep.mubr.bf16.mxu0 0
  %1230 = vmatmul.mubr.bf16.gmra.mrb[0].mxu0 %v1075
  %v1231 = vpop.f32.mrb[0].mxu0
  %v1232 = vadd.f32 0.0, %v1231
  %v1233 = vpop.f32.mrb[0].mxu0
  %v1234 = vadd.f32 0.0, %v1233
  %v1235 = vpop.f32.mrb[0].mxu0
  %v1236 = vadd.f32 0.0, %v1235
  %v1237 = vpop.f32.mrb[0].mxu0
  %v1238 = vadd.f32 0.0, %v1237
  %1239 = vmatprep.mubr.bf16.mxu0 0
  %1240 = vmatmul.mubr.bf16.gmra.mrb[0].mxu0 %v1076
  %v1241 = vpop.f32.mrb[0].mxu0
  %v1242 = vadd.f32 0.0, %v1241
  %v1243 = vpop.f32.mrb[0].mxu0
  %v1244 = vadd.f32 0.0, %v1243
  %v1245 = vpop.f32.mrb[0].mxu0
  %v1246 = vadd.f32 0.0, %v1245
  %v1247 = vpop.f32.mrb[0].mxu0
  %v1248 = vadd.f32 0.0, %v1247
  %1249 = vmatprep.mubr.bf16.mxu0 0
  %1250 = vmatmul.mubr.bf16.gmra.mrb[0].mxu0 %v1077
  %v1251 = vpop.f32.mrb[0].mxu0
  %v1252 = vadd.f32 0.0, %v1251
  %v1253 = vpop.f32.mrb[0].mxu0
  %v1254 = vadd.f32 0.0, %v1253
  %v1255 = vpop.f32.mrb[0].mxu0
  %v1256 = vadd.f32 0.0, %v1255
  %v1257 = vpop.f32.mrb[0].mxu0
  %v1258 = vadd.f32 0.0, %v1257
  %1259 = vmatprep.mubr.bf16.mxu0 0
  %1260 = vmatmul.mubr.bf16.gmra.mrb[0].mxu0 %v1078
  %v1261 = vpop.f32.mrb[0].mxu0
  %v1262 = vadd.f32 0.0, %v1261
  %v1263 = vpop.f32.mrb[0].mxu0
  %v1264 = vadd.f32 0.0, %v1263
  %v1265 = vpop.f32.mrb[0].mxu0
  %v1266 = vadd.f32 0.0, %v1265
  %v1267 = vpop.f32.mrb[0].mxu0
  %v1268 = vadd.f32 0.0, %v1267
  %1269 = vmatprep.mubr.bf16.mxu0 0
  %1270 = vmatmul.mubr.bf16.gmra.mrb[0].mxu0 %v1079
  %v1271 = vpop.f32.mrb[0].mxu0
  %v1272 = vadd.f32 0.0, %v1271
  %v1273 = vpop.f32.mrb[0].mxu0
  %v1274 = vadd.f32 0.0, %v1273
  %v1275 = vpop.f32.mrb[0].mxu0
  %v1276 = vadd.f32 0.0, %v1275
  %v1277 = vpop.f32.mrb[0].mxu0
  %v1278 = vadd.f32 0.0, %v1277
  %1279 = vmatprep.mubr.bf16.mxu0 0
  %1280 = vmatmul.mubr.bf16.gmra.mrb[0].mxu0 %v1080
  %v1281 = vpop.f32.mrb[0].mxu0
  %v1282 = vadd.f32 0.0, %v1281
  %v1283 = vpop.f32.mrb[0].mxu0
  %v1284 = vadd.f32 0.0, %v1283
  %v1285 = vpop.f32.mrb[0].mxu0
  %v1286 = vadd.f32 0.0, %v1285
  %v1287 = vpop.f32.mrb[0].mxu0
  %v1288 = vadd.f32 0.0, %v1287
  %1289 = vdwg.mxu0
  %v1290 = vpack.c.bf16 %v1216, %v1212
  %v1291 = vpack.c.bf16 %v1226, %v1222
  %v1292 = vpack.c.bf16 %v1236, %v1232
  %v1293 = vpack.c.bf16 %v1246, %v1242
  %v1294 = vpack.c.bf16 %v1256, %v1252
  %v1295 = vpack.c.bf16 %v1266, %v1262
  %v1296 = vpack.c.bf16 %v1276, %v1272
  %v1297 = vpack.c.bf16 %v1286, %v1282
  %1314 = vrot.lane.b32.xlu0 %v1212, 4
  %v1315 = vpop.permute.xlu0 %1314
  %1316 = vrot.lane.b32.xlu0 %v1216, 4
  %v1317 = vpop.permute.xlu0 %1316
  %1318 = vrot.lane.b32.xlu0 %v1222, 4
  %v1319 = vpop.permute.xlu0 %1318
  %1320 = vrot.lane.b32.xlu0 %v1226, 4
  %v1321 = vpop.permute.xlu0 %1320
  %1322 = vrot.lane.b32.xlu0 %v1232, 4
  %v1323 = vpop.permute.xlu0 %1322
  %1324 = vrot.lane.b32.xlu0 %v1236, 4
  %v1325 = vpop.permute.xlu0 %1324
  %1326 = vrot.lane.b32.xlu0 %v1242, 4
  %v1327 = vpop.permute.xlu0 %1326
  %1328 = vrot.lane.b32.xlu0 %v1246, 4
  %v1329 = vpop.permute.xlu0 %1328
  %1330 = vrot.lane.b32.xlu0 %v1252, 4
  %v1331 = vpop.permute.xlu0 %1330
  %1332 = vrot.lane.b32.xlu0 %v1256, 4
  %v1333 = vpop.permute.xlu0 %1332
  %1334 = vrot.lane.b32.xlu0 %v1262, 4
  %v1335 = vpop.permute.xlu0 %1334
  %1336 = vrot.lane.b32.xlu0 %v1266, 4
  %v1337 = vpop.permute.xlu0 %1336
  %1338 = vrot.lane.b32.xlu0 %v1272, 4
  %v1339 = vpop.permute.xlu0 %1338
  %1340 = vrot.lane.b32.xlu0 %v1276, 4
  %v1341 = vpop.permute.xlu0 %1340
  %1342 = vrot.lane.b32.xlu0 %v1282, 4
  %v1343 = vpop.permute.xlu0 %1342
  %1344 = vrot.lane.b32.xlu0 %v1286, 4
  %v1345 = vpop.permute.xlu0 %1344
  %1362 = vxpose.xlu0.b32.start [1/16] %v1315, 128
  %1363 = vxpose.xlu0.b32.cont [2/16] %v1317, 128
  %1364 = vxpose.xlu0.b32.cont [3/16] %v1319, 128
  %1365 = vxpose.xlu0.b32.cont [4/16] %v1321, 128
  %1366 = vxpose.xlu0.b32.cont [5/16] %v1323, 128
  %1367 = vxpose.xlu0.b32.cont [6/16] %v1325, 128
  %1368 = vxpose.xlu0.b32.cont [7/16] %v1327, 128
  %1369 = vxpose.xlu0.b32.cont [8/16] %v1329, 128
  %1370 = vxpose.xlu0.b32.cont [9/16] %v1331, 128
  %1371 = vxpose.xlu0.b32.cont [10/16] %v1333, 128
  %1372 = vxpose.xlu0.b32.cont [11/16] %v1335, 128
  %1373 = vxpose.xlu0.b32.cont [12/16] %v1337, 128
  %1374 = vxpose.xlu0.b32.cont [13/16] %v1339, 128
  %1375 = vxpose.xlu0.b32.cont [14/16] %v1341, 128
  %1376 = vxpose.xlu0.b32.cont [15/16] %v1343, 128
  %1377 = vxpose.xlu0.b32.end [16/16] %v1345, 128
  %v1378 = vpop.trf.xlu0
  %v1379 = vpop.trf.xlu0
  %v1380 = vpop.trf.xlu0
  %v1381 = vpop.trf.xlu0
  %v1382 = vpop.trf.xlu0
  %v1383 = vpop.trf.xlu0
  %v1384 = vpop.trf.xlu0
  %v1385 = vpop.trf.xlu0
  %v1386 = vpop.trf.xlu0
  %v1387 = vpop.trf.xlu0
  %v1388 = vpop.trf.xlu0
  %v1389 = vpop.trf.xlu0
  %v1390 = vpop.trf.xlu0
  %v1391 = vpop.trf.xlu0
  %v1392 = vpop.trf.xlu0
  %v1393 = vpop.trf.xlu0
  %1394 = vset.pattern.permute.xlu0 125
  %1395 = vperm.xlu0 %1394, %v1212
  %v1396 = vpop.permute.xlu0 %1395
  %1398 = vset.pattern.permute.xlu0 125
  %1399 = vperm.xlu0 %1398, %v1216
  %v1400 = vpop.permute.xlu0 %1399
  %1402 = vset.pattern.permute.xlu0 125
  %1403 = vperm.xlu0 %1402, %v1222
  %v1404 = vpop.permute.xlu0 %1403
  %1406 = vset.pattern.permute.xlu0 125
  %1407 = vperm.xlu0 %1406, %v1226
  %v1408 = vpop.permute.xlu0 %1407
  %1410 = vset.pattern.permute.xlu0 125
  %1411 = vperm.xlu0 %1410, %v1232
  %v1412 = vpop.permute.xlu0 %1411
  %1414 = vset.pattern.permute.xlu0 125
  %1415 = vperm.xlu0 %1414, %v1236
  %v1416 = vpop.permute.xlu0 %1415
  %1418 = vset.pattern.permute.xlu0 125
  %1419 = vperm.xlu0 %1418, %v1242
  %v1420 = vpop.permute.xlu0 %1419
  %1422 = vset.pattern.permute.xlu0 125
  %1423 = vperm.xlu0 %1422, %v1246
  %v1424 = vpop.permute.xlu0 %1423
  %1426 = vset.pattern.permute.xlu0 125
  %1427 = vperm.xlu0 %1426, %v1252
  %v1428 = vpop.permute.xlu0 %1427
  %1430 = vset.pattern.permute.xlu0 125
  %1431 = vperm.xlu0 %1430, %v1256
  %v1432 = vpop.permute.xlu0 %1431
  %1434 = vset.pattern.permute.xlu0 125
  %1435 = vperm.xlu0 %1434, %v1262
  %v1436 = vpop.permute.xlu0 %1435
  %1438 = vset.pattern.permute.xlu0 125
  %1439 = vperm.xlu0 %1438, %v1266
  %v1440 = vpop.permute.xlu0 %1439
  %1442 = vset.pattern.permute.xlu0 125
  %1443 = vperm.xlu0 %1442, %v1272
  %v1444 = vpop.permute.xlu0 %1443
  %1446 = vset.pattern.permute.xlu0 125
  %1447 = vperm.xlu0 %1446, %v1276
  %v1448 = vpop.permute.xlu0 %1447
  %1450 = vset.pattern.permute.xlu0 125
  %1451 = vperm.xlu0 %1450, %v1282
  %v1452 = vpop.permute.xlu0 %1451
  %1454 = vset.pattern.permute.xlu0 125
  %1455 = vperm.xlu0 %1454, %v1286
  %v1456 = vpop.permute.xlu0 %1455
  %v1458 = vlaneseq
  %v1459 = vshrl.u32 %v1458, 7
  %v1460 = vsub.s32 0, %v1459
  %v1461 = vrot.slane %v1378, %v1460
  %v1462 = vadd.f32 %v1396, %v1461
  %v1463 = vadd.f32 %v1400, %v1461
  %v1464 = vadd.f32 %v1404, %v1461
  %v1465 = vadd.f32 %v1408, %v1461
  %v1466 = vadd.f32 %v1412, %v1461
  %v1467 = vadd.f32 %v1416, %v1461
  %v1468 = vadd.f32 %v1420, %v1461
  %v1469 = vadd.f32 %v1424, %v1461
  %v1470 = vadd.f32 %v1428, %v1461
  %v1471 = vadd.f32 %v1432, %v1461
  %v1472 = vadd.f32 %v1436, %v1461
  %v1473 = vadd.f32 %v1440, %v1461
  %v1474 = vadd.f32 %v1444, %v1461
  %v1475 = vadd.f32 %v1448, %v1461
  %v1476 = vadd.f32 %v1452, %v1461
  %v1477 = vadd.f32 %v1456, %v1461
  %v1478 = vmul.f32 %v1462, 0.6
  %v1479 = vmul.f32 %v1463, 0.6
  %v1480 = vmul.f32 %v1464, 0.6
  %v1481 = vmul.f32 %v1465, 0.6
  %v1482 = vmul.f32 %v1466, 0.6
  %v1483 = vmul.f32 %v1467, 0.6
  %v1484 = vmul.f32 %v1468, 0.6
  %v1485 = vmul.f32 %v1469, 0.6
  %v1486 = vmul.f32 %v1470, 0.6
  %v1487 = vmul.f32 %v1471, 0.6
  %v1488 = vmul.f32 %v1472, 0.6
  %v1489 = vmul.f32 %v1473, 0.6
  %v1490 = vmul.f32 %v1474, 0.6
  %v1491 = vmul.f32 %v1475, 0.6
  %v1492 = vmul.f32 %v1476, 0.6
  %v1493 = vmul.f32 %v1477, 0.6
  %v1494 = vand.u32 2147483647, %v1462
  %v1495 = vand.u32 2147483647, %v1463
  %v1496 = vand.u32 2147483647, %v1464
  %v1497 = vand.u32 2147483647, %v1465
  %v1498 = vand.u32 2147483647, %v1466
  %v1499 = vand.u32 2147483647, %v1467
  %v1500 = vand.u32 2147483647, %v1468
  %v1501 = vand.u32 2147483647, %v1469
  %v1502 = vand.u32 2147483647, %v1470
  %v1503 = vand.u32 2147483647, %v1471
  %v1504 = vand.u32 2147483647, %v1472
  %v1505 = vand.u32 2147483647, %v1473
  %v1506 = vand.u32 2147483647, %v1474
  %v1507 = vand.u32 2147483647, %v1475
  %v1508 = vand.u32 2147483647, %v1476
  %v1509 = vand.u32 2147483647, %v1477
  %v1510 = vmul.f32 %v1494, 0.4
  %v1511 = vmul.f32 %v1495, 0.4
  %v1512 = vmul.f32 %v1496, 0.4
  %v1513 = vmul.f32 %v1497, 0.4
  %v1514 = vmul.f32 %v1498, 0.4
  %v1515 = vmul.f32 %v1499, 0.4
  %v1516 = vmul.f32 %v1500, 0.4
  %v1517 = vmul.f32 %v1501, 0.4
  %v1518 = vmul.f32 %v1502, 0.4
  %v1519 = vmul.f32 %v1503, 0.4
  %v1520 = vmul.f32 %v1504, 0.4
  %v1521 = vmul.f32 %v1505, 0.4
  %v1522 = vmul.f32 %v1506, 0.4
  %v1523 = vmul.f32 %v1507, 0.4
  %v1524 = vmul.f32 %v1508, 0.4
  %v1525 = vmul.f32 %v1509, 0.4
  %v1526 = vadd.f32 %v1478, %v1510
  %v1527 = vadd.f32 %v1479, %v1511
  %v1528 = vadd.f32 %v1480, %v1512
  %v1529 = vadd.f32 %v1481, %v1513
  %v1530 = vadd.f32 %v1482, %v1514
  %v1531 = vadd.f32 %v1483, %v1515
  %v1532 = vadd.f32 %v1484, %v1516
  %v1533 = vadd.f32 %v1485, %v1517
  %v1534 = vadd.f32 %v1486, %v1518
  %v1535 = vadd.f32 %v1487, %v1519
  %v1536 = vadd.f32 %v1488, %v1520
  %v1537 = vadd.f32 %v1489, %v1521
  %v1538 = vadd.f32 %v1490, %v1522
  %v1539 = vadd.f32 %v1491, %v1523
  %v1540 = vadd.f32 %v1492, %v1524
  %v1541 = vadd.f32 %v1493, %v1525
  %v1542 = vadd.f32 %v1526, %v76
  %v1543 = vadd.f32 %v1527, %v77
  %v1544 = vadd.f32 %v1528, %v78
  %v1545 = vadd.f32 %v1529, %v79
  %v1546 = vadd.f32 %v1530, %v80
  %v1547 = vadd.f32 %v1531, %v81
  %v1548 = vadd.f32 %v1532, %v82
  %v1549 = vadd.f32 %v1533, %v83
  %v1550 = vadd.f32 %v1534, %v84
  %v1551 = vadd.f32 %v1535, %v85
  %v1552 = vadd.f32 %v1536, %v86
  %v1553 = vadd.f32 %v1537, %v87
  %v1554 = vadd.f32 %v1538, %v88
  %v1555 = vadd.f32 %v1539, %v89
  %v1556 = vadd.f32 %v1540, %v90
  %v1557 = vadd.f32 %v1541, %v91
  %1558 = vmax.xlane.f32.xlu0 %v1542
  %v1559 = vpop.xlane.xlu0 %1558
  %1560 = vmax.xlane.f32.xlu0 %v1543
  %v1561 = vpop.xlane.xlu0 %1560
  %1562 = vmax.xlane.f32.xlu0 %v1544
  %v1563 = vpop.xlane.xlu0 %1562
  %1564 = vmax.xlane.f32.xlu0 %v1545
  %v1565 = vpop.xlane.xlu0 %1564
  %1566 = vmax.xlane.f32.xlu0 %v1546
  %v1567 = vpop.xlane.xlu0 %1566
  %1568 = vmax.xlane.f32.xlu0 %v1547
  %v1569 = vpop.xlane.xlu0 %1568
  %1570 = vmax.xlane.f32.xlu0 %v1548
  %v1571 = vpop.xlane.xlu0 %1570
  %1572 = vmax.xlane.f32.xlu0 %v1549
  %v1573 = vpop.xlane.xlu0 %1572
  %1574 = vmax.xlane.f32.xlu0 %v1550
  %v1575 = vpop.xlane.xlu0 %1574
  %1576 = vmax.xlane.f32.xlu0 %v1551
  %v1577 = vpop.xlane.xlu0 %1576
  %1578 = vmax.xlane.f32.xlu0 %v1552
  %v1579 = vpop.xlane.xlu0 %1578
  %1580 = vmax.xlane.f32.xlu0 %v1553
  %v1581 = vpop.xlane.xlu0 %1580
  %1582 = vmax.xlane.f32.xlu0 %v1554
  %v1583 = vpop.xlane.xlu0 %1582
  %1584 = vmax.xlane.f32.xlu0 %v1555
  %v1585 = vpop.xlane.xlu0 %1584
  %1586 = vmax.xlane.f32.xlu0 %v1556
  %v1587 = vpop.xlane.xlu0 %1586
  %1588 = vmax.xlane.f32.xlu0 %v1557
  %v1589 = vpop.xlane.xlu0 %1588
  %v1590 = vsub.f32 %v1542, %v1559
  %v1591 = vsub.f32 %v1543, %v1561
  %v1592 = vsub.f32 %v1544, %v1563
  %v1593 = vsub.f32 %v1545, %v1565
  %v1594 = vsub.f32 %v1546, %v1567
  %v1595 = vsub.f32 %v1547, %v1569
  %v1596 = vsub.f32 %v1548, %v1571
  %v1597 = vsub.f32 %v1549, %v1573
  %v1598 = vsub.f32 %v1550, %v1575
  %v1599 = vsub.f32 %v1551, %v1577
  %v1600 = vsub.f32 %v1552, %v1579
  %v1601 = vsub.f32 %v1553, %v1581
  %v1602 = vsub.f32 %v1554, %v1583
  %v1603 = vsub.f32 %v1555, %v1585
  %v1604 = vsub.f32 %v1556, %v1587
  %v1605 = vsub.f32 %v1557, %v1589
  %v1606 = vmul.f32 %v1590, 1.442695
  %v1607 = vpow.pop %v1606
  %v1608 = vmul.f32 %v1591, 1.442695
  %v1609 = vpow.pop %v1608
  %v1610 = vmul.f32 %v1592, 1.442695
  %v1611 = vpow.pop %v1610
  %v1612 = vmul.f32 %v1593, 1.442695
  %v1613 = vpow.pop %v1612
  %v1614 = vmul.f32 %v1594, 1.442695
  %v1615 = vpow.pop %v1614
  %v1616 = vmul.f32 %v1595, 1.442695
  %v1617 = vpow.pop %v1616
  %v1618 = vmul.f32 %v1596, 1.442695
  %v1619 = vpow.pop %v1618
  %v1620 = vmul.f32 %v1597, 1.442695
  %v1621 = vpow.pop %v1620
  %v1622 = vmul.f32 %v1598, 1.442695
  %v1623 = vpow.pop %v1622
  %v1624 = vmul.f32 %v1599, 1.442695
  %v1625 = vpow.pop %v1624
  %v1626 = vmul.f32 %v1600, 1.442695
  %v1627 = vpow.pop %v1626
  %v1628 = vmul.f32 %v1601, 1.442695
  %v1629 = vpow.pop %v1628
  %v1630 = vmul.f32 %v1602, 1.442695
  %v1631 = vpow.pop %v1630
  %v1632 = vmul.f32 %v1603, 1.442695
  %v1633 = vpow.pop %v1632
  %v1634 = vmul.f32 %v1604, 1.442695
  %v1635 = vpow.pop %v1634
  %v1636 = vmul.f32 %v1605, 1.442695
  %v1637 = vpow.pop %v1636
  %v1638 = vpack.c.bf16 %v1609, %v1607
  %v1639 = vpack.c.bf16 %v1613, %v1611
  %v1640 = vpack.c.bf16 %v1617, %v1615
  %v1641 = vpack.c.bf16 %v1621, %v1619
  %v1642 = vpack.c.bf16 %v1625, %v1623
  %v1643 = vpack.c.bf16 %v1629, %v1627
  %v1644 = vpack.c.bf16 %v1633, %v1631
  %v1645 = vpack.c.bf16 %v1637, %v1635
  %1646 = vmatprep.subr.bf16.mxu0 0
  %1647 = vmatpush1.bf16.msra.mxu0 %v1290
  %1648 = vmatprep.subr.bf16.mxu0 0
  %1649 = vmatpush1.bf16.msra.mxu0 %v1291
  %1650 = vmatprep.subr.bf16.mxu0 0
  %1651 = vmatpush1.bf16.msra.mxu0 %v1292
  %1652 = vmatprep.subr.bf16.mxu0 0
  %1653 = vmatpush1.bf16.msra.mxu0 %v1293
  %1654 = vmatprep.subr.bf16.mxu0 0
  %1655 = vmatpush1.bf16.msra.mxu0 %v1294
  %1656 = vmatprep.subr.bf16.mxu0 0
  %1657 = vmatpush1.bf16.msra.mxu0 %v1295
  %1658 = vmatprep.subr.bf16.mxu0 0
  %1659 = vmatpush1.bf16.msra.mxu0 %v1296
  %1660 = vmatprep.subr.bf16.mxu0 0
  %1661 = vmatpush1.bf16.msra.mxu0 %v1297
  %1662 = vmatprep.subr.bf16.mxu0 0
  %1663 = vmatpush1.bf16.msra.mxu0 0
  %1664 = vmatprep.subr.bf16.mxu0 0
  %1665 = vmatpush1.bf16.msra.mxu0 0
  %1666 = vmatprep.subr.bf16.mxu0 0
  %1667 = vmatpush1.bf16.msra.mxu0 0
  %1668 = vmatprep.subr.bf16.mxu0 0
  %1669 = vmatpush1.bf16.msra.mxu0 0
  %1670 = vmatprep.subr.bf16.mxu0 0
  %1671 = vmatpush1.bf16.msra.mxu0 0
  %1672 = vmatprep.subr.bf16.mxu0 0
  %1673 = vmatpush1.bf16.msra.mxu0 0
  %1674 = vmatprep.subr.bf16.mxu0 0
  %1675 = vmatpush1.bf16.msra.mxu0 0
  %1676 = vmatprep.subr.bf16.mxu0 0
  %1677 = vmatpush1.bf16.msra.mxu0 0
  %1678 = vmatprep.mubr.bf16.mxu0 0
  %1679 = vmatmul.mubr.bf16.gmra.mrb[0].mxu0 %v1638
  %v1680 = vpop.f32.mrb[0].mxu0
  %v1681 = vadd.f32 0.0, %v1680
  %v1682 = vpop.f32.mrb[0].mxu0
  %v1683 = vpop.f32.mrb[0].mxu0
  %v1684 = vadd.f32 0.0, %v1683
  %v1685 = vpop.f32.mrb[0].mxu0
  %1686 = vmatprep.mubr.bf16.mxu0 0
  %1687 = vmatmul.mubr.bf16.gmra.mrb[0].mxu0 %v1639
  %v1688 = vpop.f32.mrb[0].mxu0
  %v1689 = vadd.f32 0.0, %v1688
  %v1690 = vpop.f32.mrb[0].mxu0
  %v1691 = vpop.f32.mrb[0].mxu0
  %v1692 = vadd.f32 0.0, %v1691
  %v1693 = vpop.f32.mrb[0].mxu0
  %1694 = vmatprep.mubr.bf16.mxu0 0
  %1695 = vmatmul.mubr.bf16.gmra.mrb[0].mxu0 %v1640
  %v1696 = vpop.f32.mrb[0].mxu0
  %v1697 = vadd.f32 0.0, %v1696
  %v1698 = vpop.f32.mrb[0].mxu0
  %v1699 = vpop.f32.mrb[0].mxu0
  %v1700 = vadd.f32 0.0, %v1699
  %v1701 = vpop.f32.mrb[0].mxu0
  %1702 = vmatprep.mubr.bf16.mxu0 0
  %1703 = vmatmul.mubr.bf16.gmra.mrb[0].mxu0 %v1641
  %v1704 = vpop.f32.mrb[0].mxu0
  %v1705 = vadd.f32 0.0, %v1704
  %v1706 = vpop.f32.mrb[0].mxu0
  %v1707 = vpop.f32.mrb[0].mxu0
  %v1708 = vadd.f32 0.0, %v1707
  %v1709 = vpop.f32.mrb[0].mxu0
  %1710 = vmatprep.mubr.bf16.mxu0 0
  %1711 = vmatmul.mubr.bf16.gmra.mrb[0].mxu0 %v1642
  %v1712 = vpop.f32.mrb[0].mxu0
  %v1713 = vadd.f32 0.0, %v1712
  %v1714 = vpop.f32.mrb[0].mxu0
  %v1715 = vpop.f32.mrb[0].mxu0
  %v1716 = vadd.f32 0.0, %v1715
  %v1717 = vpop.f32.mrb[0].mxu0
  %1718 = vmatprep.mubr.bf16.mxu0 0
  %1719 = vmatmul.mubr.bf16.gmra.mrb[0].mxu0 %v1643
  %v1720 = vpop.f32.mrb[0].mxu0
  %v1721 = vadd.f32 0.0, %v1720
  %v1722 = vpop.f32.mrb[0].mxu0
  %v1723 = vpop.f32.mrb[0].mxu0
  %v1724 = vadd.f32 0.0, %v1723
  %v1725 = vpop.f32.mrb[0].mxu0
  %1726 = vmatprep.mubr.bf16.mxu0 0
  %1727 = vmatmul.mubr.bf16.gmra.mrb[0].mxu0 %v1644
  %v1728 = vpop.f32.mrb[0].mxu0
  %v1729 = vadd.f32 0.0, %v1728
  %v1730 = vpop.f32.mrb[0].mxu0
  %v1731 = vpop.f32.mrb[0].mxu0
  %v1732 = vadd.f32 0.0, %v1731
  %v1733 = vpop.f32.mrb[0].mxu0
  %1734 = vmatprep.mubr.bf16.mxu0 0
  %1735 = vmatmul.mubr.bf16.gmra.mrb[0].mxu0 %v1645
  %v1736 = vpop.f32.mrb[0].mxu0
  %v1737 = vadd.f32 0.0, %v1736
  %v1738 = vpop.f32.mrb[0].mxu0
  %v1739 = vpop.f32.mrb[0].mxu0
  %v1740 = vadd.f32 0.0, %v1739
  %v1741 = vpop.f32.mrb[0].mxu0
  %1742 = vdwg.mxu0
  %vm1743 = vcmp.gt.f32.partialorder %v1681, 0.0
  %vm1744 = vcmp.gt.f32.partialorder %v1684, 0.0
  %vm1745 = vcmp.gt.f32.partialorder %v1689, 0.0
  %vm1746 = vcmp.gt.f32.partialorder %v1692, 0.0
  %vm1747 = vcmp.gt.f32.partialorder %v1697, 0.0
  %vm1748 = vcmp.gt.f32.partialorder %v1700, 0.0
  %vm1749 = vcmp.gt.f32.partialorder %v1705, 0.0
  %vm1750 = vcmp.gt.f32.partialorder %v1708, 0.0
  %vm1751 = vcmp.gt.f32.partialorder %v1713, 0.0
  %vm1752 = vcmp.gt.f32.partialorder %v1716, 0.0
  %vm1753 = vcmp.gt.f32.partialorder %v1721, 0.0
  %vm1754 = vcmp.gt.f32.partialorder %v1724, 0.0
  %vm1755 = vcmp.gt.f32.partialorder %v1729, 0.0
  %vm1756 = vcmp.gt.f32.partialorder %v1732, 0.0
  %vm1757 = vcmp.gt.f32.partialorder %v1737, 0.0
  %vm1758 = vcmp.gt.f32.partialorder %v1740, 0.0
  %v1759 = vsel %vm1743, %v1681, 1.0
  %v1760 = vsel %vm1744, %v1684, 1.0
  %v1761 = vsel %vm1745, %v1689, 1.0
  %v1762 = vsel %vm1746, %v1692, 1.0
  %v1763 = vsel %vm1747, %v1697, 1.0
  %v1764 = vsel %vm1748, %v1700, 1.0
  %v1765 = vsel %vm1749, %v1705, 1.0
  %v1766 = vsel %vm1750, %v1708, 1.0
  %v1767 = vsel %vm1751, %v1713, 1.0
  %v1768 = vsel %vm1752, %v1716, 1.0
  %v1769 = vsel %vm1753, %v1721, 1.0
  %v1770 = vsel %vm1754, %v1724, 1.0
  %v1771 = vsel %vm1755, %v1729, 1.0
  %v1772 = vsel %vm1756, %v1732, 1.0
  %v1773 = vsel %vm1757, %v1737, 1.0
  %v1774 = vsel %vm1758, %v1740, 1.0
  %v1775 = vrcp.pop %v1759
  %v1776 = vrcp.pop %v1760
  %v1777 = vrcp.pop %v1761
  %v1778 = vrcp.pop %v1762
  %v1779 = vrcp.pop %v1763
  %v1780 = vrcp.pop %v1764
  %v1781 = vrcp.pop %v1765
  %v1782 = vrcp.pop %v1766
  %v1783 = vrcp.pop %v1767
  %v1784 = vrcp.pop %v1768
  %v1785 = vrcp.pop %v1769
  %v1786 = vrcp.pop %v1770
  %v1787 = vrcp.pop %v1771
  %v1788 = vrcp.pop %v1772
  %v1789 = vrcp.pop %v1773
  %v1790 = vrcp.pop %v1774
  %v1791 = vmul.f32 %v1775, %v156
  %v1792 = vmul.f32 %v1776, %v157
  %v1793 = vmul.f32 %v1777, %v158
  %v1794 = vmul.f32 %v1778, %v159
  %v1795 = vmul.f32 %v1779, %v160
  %v1796 = vmul.f32 %v1780, %v161
  %v1797 = vmul.f32 %v1781, %v162
  %v1798 = vmul.f32 %v1782, %v163
  %v1799 = vmul.f32 %v1783, %v164
  %v1800 = vmul.f32 %v1784, %v165
  %v1801 = vmul.f32 %v1785, %v166
  %v1802 = vmul.f32 %v1786, %v167
  %v1803 = vmul.f32 %v1787, %v168
  %v1804 = vmul.f32 %v1788, %v169
  %v1805 = vmul.f32 %v1789, %v170
  %v1806 = vmul.f32 %v1790, %v171
  %1808 = vset.pattern.permute.xlu0 126
  %1809 = vperm.xlu0 %1808, %v1791
  %v1810 = vpop.permute.xlu0 %1809
  %1813 = vset.pattern.permute.xlu0 126
  %1814 = vperm.xlu0 %1813, %v1792
  %v1815 = vpop.permute.xlu0 %1814
  %1818 = vset.pattern.permute.xlu0 126
  %1819 = vperm.xlu0 %1818, %v1793
  %v1820 = vpop.permute.xlu0 %1819
  %1823 = vset.pattern.permute.xlu0 126
  %1824 = vperm.xlu0 %1823, %v1794
  %v1825 = vpop.permute.xlu0 %1824
  %1828 = vset.pattern.permute.xlu0 126
  %1829 = vperm.xlu0 %1828, %v1795
  %v1830 = vpop.permute.xlu0 %1829
  %1833 = vset.pattern.permute.xlu0 126
  %1834 = vperm.xlu0 %1833, %v1796
  %v1835 = vpop.permute.xlu0 %1834
  %1838 = vset.pattern.permute.xlu0 126
  %1839 = vperm.xlu0 %1838, %v1797
  %v1840 = vpop.permute.xlu0 %1839
  %1843 = vset.pattern.permute.xlu0 126
  %1844 = vperm.xlu0 %1843, %v1798
  %v1845 = vpop.permute.xlu0 %1844
  %1848 = vset.pattern.permute.xlu0 126
  %1849 = vperm.xlu0 %1848, %v1799
  %v1850 = vpop.permute.xlu0 %1849
  %1853 = vset.pattern.permute.xlu0 126
  %1854 = vperm.xlu0 %1853, %v1800
  %v1855 = vpop.permute.xlu0 %1854
  %1858 = vset.pattern.permute.xlu0 126
  %1859 = vperm.xlu0 %1858, %v1801
  %v1860 = vpop.permute.xlu0 %1859
  %1863 = vset.pattern.permute.xlu0 126
  %1864 = vperm.xlu0 %1863, %v1802
  %v1865 = vpop.permute.xlu0 %1864
  %1868 = vset.pattern.permute.xlu0 126
  %1869 = vperm.xlu0 %1868, %v1803
  %v1870 = vpop.permute.xlu0 %1869
  %1873 = vset.pattern.permute.xlu0 126
  %1874 = vperm.xlu0 %1873, %v1804
  %v1875 = vpop.permute.xlu0 %1874
  %1878 = vset.pattern.permute.xlu0 126
  %1879 = vperm.xlu0 %1878, %v1805
  %v1880 = vpop.permute.xlu0 %1879
  %1883 = vset.pattern.permute.xlu0 126
  %1884 = vperm.xlu0 %1883, %v1806
  %v1885 = vpop.permute.xlu0 %1884
  %v1887 = vmul.f32 %v1681, %v1810
  %v1888 = vmul.f32 %v1684, %v1815
  %v1889 = vmul.f32 %v1689, %v1820
  %v1890 = vmul.f32 %v1692, %v1825
  %v1891 = vmul.f32 %v1697, %v1830
  %v1892 = vmul.f32 %v1700, %v1835
  %v1893 = vmul.f32 %v1705, %v1840
  %v1894 = vmul.f32 %v1708, %v1845
  %v1895 = vmul.f32 %v1713, %v1850
  %v1896 = vmul.f32 %v1716, %v1855
  %v1897 = vmul.f32 %v1721, %v1860
  %v1898 = vmul.f32 %v1724, %v1865
  %v1899 = vmul.f32 %v1729, %v1870
  %v1900 = vmul.f32 %v1732, %v1875
  %v1901 = vmul.f32 %v1737, %v1880
  %v1902 = vmul.f32 %v1740, %v1885
  %v1903 = vadd.f32 %v1887, %v1214
  %v1904 = vadd.f32 %v1888, %v1218
  %v1905 = vadd.f32 %v1889, %v1224
  %v1906 = vadd.f32 %v1890, %v1228
  %v1907 = vadd.f32 %v1891, %v1234
  %v1908 = vadd.f32 %v1892, %v1238
  %v1909 = vadd.f32 %v1893, %v1244
  %v1910 = vadd.f32 %v1894, %v1248
  %v1911 = vadd.f32 %v1895, %v1254
  %v1912 = vadd.f32 %v1896, %v1258
  %v1913 = vadd.f32 %v1897, %v1264
  %v1914 = vadd.f32 %v1898, %v1268
  %v1915 = vadd.f32 %v1899, %v1274
  %v1916 = vadd.f32 %v1900, %v1278
  %v1917 = vadd.f32 %v1901, %v1284
  %v1918 = vadd.f32 %v1902, %v1288
  %v1919 = vld [vmem:[%s5] sm:$0x1]
  %v1921 = vlaneseq
  %v1922 = vshrl.u32 %v1921, 7
  %v1923 = vsub.s32 0, %v1922
  %v1924 = vrot.slane %v1919, %v1923
  %v1926 = vadd.f32 %v1903, %v1924
  %v1927 = vadd.f32 %v1904, %v1924
  %v1928 = vadd.f32 %v1905, %v1924
  %v1929 = vadd.f32 %v1906, %v1924
  %v1930 = vadd.f32 %v1907, %v1924
  %v1931 = vadd.f32 %v1908, %v1924
  %v1932 = vadd.f32 %v1909, %v1924
  %v1933 = vadd.f32 %v1910, %v1924
  %v1934 = vadd.f32 %v1911, %v1924
  %v1935 = vadd.f32 %v1912, %v1924
  %v1936 = vadd.f32 %v1913, %v1924
  %v1937 = vadd.f32 %v1914, %v1924
  %v1938 = vadd.f32 %v1915, %v1924
  %v1939 = vadd.f32 %v1916, %v1924
  %v1940 = vadd.f32 %v1917, %v1924
  %v1941 = vadd.f32 %v1918, %v1924
  %v1942 = vmax.f32 %v1926, 0.0
  %v1943 = vmax.f32 %v1927, 0.0
  %v1944 = vmax.f32 %v1928, 0.0
  %v1945 = vmax.f32 %v1929, 0.0
  %v1946 = vmax.f32 %v1930, 0.0
  %v1947 = vmax.f32 %v1931, 0.0
  %v1948 = vmax.f32 %v1932, 0.0
  %v1949 = vmax.f32 %v1933, 0.0
  %v1950 = vmax.f32 %v1934, 0.0
  %v1951 = vmax.f32 %v1935, 0.0
  %v1952 = vmax.f32 %v1936, 0.0
  %v1953 = vmax.f32 %v1937, 0.0
  %v1954 = vmax.f32 %v1938, 0.0
  %v1955 = vmax.f32 %v1939, 0.0
  %v1956 = vmax.f32 %v1940, 0.0
  %v1957 = vmax.f32 %v1941, 0.0
  %1958 = vst [vmem:[%s6] sm:$0xff] %v1942
  %1959 = vst [vmem:[%s6 + $0x8] sm:$0xff] %v1943
  %1960 = vst [vmem:[%s6 + $0x10] sm:$0xff] %v1944
  %1961 = vst [vmem:[%s6 + $0x18] sm:$0xff] %v1945
  %1962 = vst [vmem:[%s6 + $0x20] sm:$0xff] %v1946
  %1963 = vst [vmem:[%s6 + $0x28] sm:$0xff] %v1947
  %1964 = vst [vmem:[%s6 + $0x30] sm:$0xff] %v1948
  %1965 = vst [vmem:[%s6 + $0x38] sm:$0xff] %v1949
  %1966 = vst [vmem:[%s6 + $0x40] sm:$0xff] %v1950
  %1967 = vst [vmem:[%s6 + $0x48] sm:$0xff] %v1951
  %1968 = vst [vmem:[%s6 + $0x50] sm:$0xff] %v1952
  %1969 = vst [vmem:[%s6 + $0x58] sm:$0xff] %v1953
  %1970 = vst [vmem:[%s6 + $0x60] sm:$0xff] %v1954
  %1971 = vst [vmem:[%s6 + $0x68] sm:$0xff] %v1955
  %1972 = vst [vmem:[%s6 + $0x70] sm:$0xff] %v1956
  %1973 = vst [vmem:[%s6 + $0x78] sm:$0xff] %v1957
  // Predicated region
  $region26: #{gat_forward.1} parent=0 // pred_check
    _
  $region27: #{gat_forward.1} parent=0 // pred_check_branch
    %1975 = sbr.rel (0) target = $region29
  $region28: #{gat_forward.1} parent=0 // pred_region
    _
  $region29: #{gat_forward.1} parent=0 // pred_fallthru
    _
  // Predicated region
  $region30: #{gat_forward.1} parent=0 // pred_check
    _
  $region31: #{gat_forward.1} parent=0 // pred_check_branch
    %1977 = sbr.rel (0) target = $region33
  $region32: #{gat_forward.1} parent=0 // pred_region
    _
  $region33: #{gat_forward.1} parent=0 // pred_fallthru
    _

</llo_original>
